<compile_context>
chip_gen: v6e
topology: v6e:2x2x1
jax: 0.10.0
libtpu: 0.0.40
codegen_flags: <defaults>
</compile_context>

<pallas_src>
import functools

import jax
import jax.numpy as jnp
from jax.experimental import pallas as pl
from jax.experimental.pallas import tpu as pltpu


def _mhsa_kernel(x_ref, wq_ref, wk_ref, wv_ref, wp_ref, b_ref, o_ref,
                 k_cache, v_cache, ho_ref, *,
                 heads, head_dim, q_tile, compute_dtype):
    """Grid = (batch, q_tiles). One step processes q_tile query rows of one batch."""
    qi = pl.program_id(1)
    cdt = compute_dtype
    f32 = jnp.float32
    approx = jnp.dtype(cdt) != jnp.dtype(f32)
    # bf16 exp (EUP) on the bf16 path; f32 exp on the f32 path.
    # TODO(synk): on v5e (no bf16 EUP/VPU) callers should force f32 exp here.
    exp_dtype = cdt if approx else f32

    # ---- K/V projections: one full-width (N,C)@(C,C) matmul each, computed
    #      once per batch element and scattered into per-head caches.
    #      Correctness relies on the q axis being the innermost, sequentially
    #      executed grid axis (see grid / dimension_semantics in mhsa_forward).
    @pl.when(qi == 0)
    def _():
        x_full = x_ref[0]                                                    # (N, C) cdt
        k_full = jnp.dot(x_full, wk_ref[...], preferred_element_type=f32)    # (N, C) f32
        v_full = jnp.dot(x_full, wv_ref[...], preferred_element_type=cdt)    # (N, C) cdt
        for h in range(heads):
            sl = slice(h * head_dim, (h + 1) * head_dim)
            # K stored transposed (D, N): one small transpose per head per
            # batch element, amortized over all q-tiles of that batch element.
            k_cache[h] = k_full[:, sl].T.astype(cdt)
            v_cache[h] = v_full[:, sl]

    # ---- Query rows for this tile; full-width Q projection (scale folded in).
    row0 = pl.multiple_of(qi * q_tile, q_tile)
    xq = x_ref[0, pl.ds(row0, q_tile), :]                                    # (TQ, C) cdt
    q_full = jnp.dot(xq, wq_ref[...], preferred_element_type=cdt)            # (TQ, C)

    # ---- Per-head attention.  Each head's output lands in its static lane
    #      slot of the (TQ, C) scratch; no cross-iteration live values.
    for h in range(heads):
        sl = slice(h * head_dim, (h + 1) * head_dim)
        q_h = q_full[:, sl]                                                  # (TQ, D)
        s = jnp.dot(q_h, k_cache[h], preferred_element_type=f32)             # (TQ, N)
        m = jnp.max(s, axis=-1, keepdims=True)                               # f32
        p = jnp.exp((s - m).astype(exp_dtype))                               # unnormalized
        denom = jnp.sum(p.astype(f32), axis=-1, keepdims=True)               # f32
        pv = jnp.dot(p.astype(cdt), v_cache[h], preferred_element_type=f32)  # (TQ, D)
        # Normalize AFTER the PV matmul: scale (TQ, D) instead of (TQ, N).
        pv = pv * pl.reciprocal(denom, approx=approx)
        # attn_drop with p=0.0 is the identity -> no-op.
        ho_ref[:, sl] = pv.astype(cdt)

    # ---- One fused output projection per q-tile (+ bias broadcast).
    out = jnp.dot(ho_ref[...], wp_ref[...], preferred_element_type=f32)      # (TQ, C)
    out = out + b_ref[...]                                                   # (1, C) broadcast
    # proj_drop with p=0.0 is the identity -> no-op.
    o_ref[0] = out.astype(o_ref.dtype)


def mhsa_forward(x, wqkv_t, wproj_t, bproj, *, heads, q_tile=None,
                 compute_dtype=jnp.bfloat16):
    """x: (B, N, C); wqkv_t: (C, 3C); wproj_t: (C, C); bproj: (C,) or (1, C)."""
    B, N, C = x.shape
    assert C % heads == 0
    D = C // heads
    scale = float(D) ** (-0.5)

    if q_tile is None:
        # 128 keeps the per-tile footprint inside v7x's smaller VMEM; sweep
        # 128/256 on v5e/v6e where 128 MiB is available.
        q_tile = min(N, 128)
    assert N % q_tile == 0, "N must be divisible by the Q tile size"
    num_q_tiles = N // q_tile
    # TODO(synk): production (ViT-scale) callers should pad N to a multiple of
    # q_tile (ideally 128) and C to a multiple of 128 so blocks stay lane-dense.
    # TODO(synk): on v7x (2 TensorCores) with B == 1 the q axis is 'arbitrary'
    # (cache dependency), so a second parallel axis (e.g. head groups with a
    # separate K/V-projection pallas_call) is needed to feed both cores.

    cdt = jnp.dtype(compute_dtype)

    # Full-width per-projection weights; head h occupies columns [h*D, (h+1)*D).
    # The softmax scale is folded into the Q weights on the host.
    wq = (wqkv_t[:, 0 * C:1 * C] * scale).astype(cdt)
    wk = wqkv_t[:, 1 * C:2 * C].astype(cdt)
    wv = wqkv_t[:, 2 * C:3 * C].astype(cdt)
    wp = wproj_t.astype(cdt)
    b2d = jnp.asarray(bproj, jnp.float32).reshape(1, C)
    x_c = x.astype(cdt)  # halves the (B, N, C) HBM->VMEM DMA on the bf16 path

    kernel = functools.partial(_mhsa_kernel, heads=heads, head_dim=D,
                               q_tile=q_tile, compute_dtype=cdt)

    cost = pl.CostEstimate(
        flops=int(2 * B * N * C * 3 * C           # QKV projections
                  + 4 * B * heads * N * N * D     # scores + p @ v
                  + 2 * B * N * C * C),           # output projection
        transcendentals=int(B * heads * N * N),   # exp in softmax
        bytes_accessed=int(B * N * C * (cdt.itemsize + x.dtype.itemsize)  # x in + out
                           + 4 * C * C * cdt.itemsize + 4 * C),
    )

    # Rough VMEM budget.  Grid-constant blocks (x, weights, bias) are still
    # double-buffered by the pipeline, so they are counted twice.
    vmem_est = (2 * N * C * cdt.itemsize                  # x block
                + 2 * 4 * C * C * cdt.itemsize            # wq/wk/wv/wproj
                + 2 * C * 4                               # bias
                + 2 * q_tile * C * x.dtype.itemsize       # output block
                + 2 * heads * N * D * cdt.itemsize        # K + V caches
                + q_tile * C * cdt.itemsize               # stacked head outputs
                + 4 * q_tile * N * 4)                     # (TQ, N) score/prob temps
    compiler_kwargs = dict(dimension_semantics=("parallel", "arbitrary"))
    if vmem_est > 16 * 1024 * 1024:
        # TODO(synk): on v7x (64 MiB physical VMEM per core) long sequences
        # should switch to a kv-tiled online-softmax variant instead of
        # raising the limit further.
        compiler_kwargs["vmem_limit_bytes"] = min(int(vmem_est * 5 // 4),
                                                  96 * 1024 * 1024)

    return pl.pallas_call(
        kernel,
        out_shape=jax.ShapeDtypeStruct((B, N, C), x.dtype),
        grid_spec=pltpu.PrefetchScalarGridSpec(
            num_scalar_prefetch=0,
            # K/V caches are (re)filled at qi == 0, so the q axis MUST remain
            # the innermost, sequentially executed ('arbitrary') grid axis.
            grid=(B, num_q_tiles),
            in_specs=[
                pl.BlockSpec((1, N, C), lambda b, q: (b, 0, 0)),    # x (full sequence)
                pl.BlockSpec((C, C), lambda b, q: (0, 0)),          # wq (pre-scaled)
                pl.BlockSpec((C, C), lambda b, q: (0, 0)),          # wk
                pl.BlockSpec((C, C), lambda b, q: (0, 0)),          # wv
                pl.BlockSpec((C, C), lambda b, q: (0, 0)),          # wproj
                pl.BlockSpec((1, C), lambda b, q: (0, 0)),          # proj bias
            ],
            out_specs=pl.BlockSpec((1, q_tile, C), lambda b, q: (b, q, 0)),
            scratch_shapes=[
                pltpu.VMEM((heads, D, N), cdt),    # K cache, transposed (D, N)
                pltpu.VMEM((heads, N, D), cdt),    # V cache
                pltpu.VMEM((q_tile, C), cdt),      # stacked per-head outputs
            ],
        ),
        compiler_params=pltpu.CompilerParams(**compiler_kwargs),
        cost_estimate=cost,
    )(x_c, wq, wk, wv, wp, b2d)


def mhsa_reference(x, wqkv_t, wproj_t, bproj, *, heads):
    """Pure-JAX reference mirroring the PyTorch forward exactly (f32)."""
    B, N, C = x.shape
    D = C // heads
    scale = float(D) ** (-0.5)
    qkv = (x @ wqkv_t).reshape(B, N, 3, heads, D).transpose(2, 0, 3, 1, 4)
    q, k, v = qkv[0], qkv[1], qkv[2]                      # (B, H, N, D)
    attn = (q @ jnp.swapaxes(k, -2, -1)) * scale
    attn = jax.nn.softmax(attn, axis=-1)
    out = (attn @ v).transpose(0, 2, 1, 3).reshape(B, N, C)
    return out @ wproj_t + jnp.reshape(bproj, (C,))


if __name__ == "__main__":
    # Small deterministic setup consistent with the module's forward: (B, N, C).
    B, N, C, HEADS = 2, 8, 32, 4

    key = jax.random.PRNGKey(0)
    kx, kq, kp, kb = jax.random.split(key, 4)

    x = jax.random.normal(kx, (B, N, C), dtype=jnp.float32)
    # nn.Linear(C, 3C, bias=False): weight (3C, C) -> passed transposed (C, 3C).
    wqkv_t = (jax.random.normal(kq, (3 * C, C), dtype=jnp.float32) * 0.05).T
    # nn.Linear(C, C): weight (C, C) + bias (C,); weight passed transposed.
    wproj_t = (jax.random.normal(kp, (C, C), dtype=jnp.float32) * 0.05).T
    bproj = jax.random.normal(kb, (C,), dtype=jnp.float32) * 0.05

    # TODO(synk): attn_drop / proj_drop use p=0.0 (identity); stochastic dropout
    # would need pltpu.prng_* inside the kernel.

    ref = mhsa_reference(x, wqkv_t, wproj_t, bproj, heads=HEADS)

    # 1) f32 MXU inputs: tight numerics validation against the module semantics.
    out_f32 = jax.block_until_ready(
        mhsa_forward(x, wqkv_t, wproj_t, bproj, heads=HEADS,
                     compute_dtype=jnp.float32))
    assert out_f32.shape == (B, N, C)
    assert jnp.allclose(out_f32, ref, atol=1e-4, rtol=1e-4), "f32 mismatch vs reference"

    # 2) bf16 MXU inputs (f32 accumulation, f32 softmax stats, approx reciprocal):
    #    the perf configuration.  Note: pl.reciprocal(approx=True) + bf16 exp
    #    inject small relative error into the softmax normalization.
    out_bf16 = jax.block_until_ready(
        mhsa_forward(x, wqkv_t, wproj_t, bproj, heads=HEADS,
                     compute_dtype=jnp.bfloat16))
    assert out_bf16.shape == (B, N, C)
    assert jnp.allclose(out_bf16, ref, atol=2e-2, rtol=2e-2), "bf16 mismatch vs reference"

    print("KERNEL_OK")
</pallas_src>

<mosaic_0001>
module attributes {stable_mosaic.version = 11 : i64} {
  func.func @_mhsa_kernel(%arg0: i32, %arg1: i32, %arg2: memref<1x8x32xf32, #tpu.memory_space<vmem>>, %arg3: memref<32x32xf32, #tpu.memory_space<vmem>>, %arg4: memref<32x32xf32, #tpu.memory_space<vmem>>, %arg5: memref<32x32xf32, #tpu.memory_space<vmem>>, %arg6: memref<32x32xf32, #tpu.memory_space<vmem>>, %arg7: memref<1x32xf32, #tpu.memory_space<vmem>>, %arg8: memref<1x8x32xf32, #tpu.memory_space<vmem>>, %arg9: memref<4x8x8xf32, #tpu.memory_space<vmem>>, %arg10: memref<4x8x8xf32, #tpu.memory_space<vmem>>, %arg11: memref<8x32xf32, #tpu.memory_space<vmem>>) attributes {dimension_semantics = [#tpu.dimension_semantics<parallel>, #tpu.dimension_semantics<arbitrary>], iteration_bounds = array<i64: 2, 1>, scalar_prefetch = 0 : i64, scratch_operands = 3 : i64, tpu.core_type = #tpu.core_type<tc>, window_params = [{transform_indices = @transform_0, window_bounds = array<i64: 1, 8, 32>}, {pipeline_mode = #tpu.pipeline_mode<synchronous>, transform_indices = @transform_1, window_bounds = array<i64: 32, 32>}, {pipeline_mode = #tpu.pipeline_mode<synchronous>, transform_indices = @transform_2, window_bounds = array<i64: 32, 32>}, {pipeline_mode = #tpu.pipeline_mode<synchronous>, transform_indices = @transform_3, window_bounds = array<i64: 32, 32>}, {pipeline_mode = #tpu.pipeline_mode<synchronous>, transform_indices = @transform_4, window_bounds = array<i64: 32, 32>}, {pipeline_mode = #tpu.pipeline_mode<synchronous>, transform_indices = @transform_5, window_bounds = array<i64: 1, 32>}, {transform_indices = @transform_6, window_bounds = array<i64: 1, 8, 32>}]} {
    %c0_i32 = arith.constant 0 : i32
    %0 = arith.cmpi eq, %arg1, %c0_i32 : i32
    %1 = arith.extui %0 : i1 to i32
    %c0_i32_0 = arith.constant 0 : i32
    %2 = arith.cmpi ne, %1, %c0_i32_0 : i32
    scf.if %2 {
      %c0_56 = arith.constant 0 : index
      %c0_57 = arith.constant 0 : index
      %c0_58 = arith.constant 0 : index
      %91 = vector.load %arg2[%c0_56, %c0_57, %c0_58] : memref<1x8x32xf32, #tpu.memory_space<vmem>>, vector<1x8x32xf32>
      %92 = vector.shape_cast %91 : vector<1x8x32xf32> to vector<8x32xf32>
      %c0_59 = arith.constant 0 : index
      %c0_60 = arith.constant 0 : index
      %93 = vector.load %arg4[%c0_59, %c0_60] : memref<32x32xf32, #tpu.memory_space<vmem>>, vector<32x32xf32>
      %cst_61 = arith.constant dense<0.000000e+00> : vector<8x32xf32>
      %94 = tpu.matmul %92, %93, %cst_61 {dimension_numbers = #tpu.dot_dimension_numbers<[1], [0], [0], [1], [0, 0, 1, 1], [], []>} : vector<8x32xf32>, vector<32x32xf32>, vector<8x32xf32> -> vector<8x32xf32>
      %c0_62 = arith.constant 0 : index
      %c0_63 = arith.constant 0 : index
      %95 = vector.load %arg5[%c0_62, %c0_63] : memref<32x32xf32, #tpu.memory_space<vmem>>, vector<32x32xf32>
      %cst_64 = arith.constant dense<0.000000e+00> : vector<8x32xf32>
      %96 = tpu.matmul %92, %95, %cst_64 {dimension_numbers = #tpu.dot_dimension_numbers<[1], [0], [0], [1], [0, 0, 1, 1], [], []>} : vector<8x32xf32>, vector<32x32xf32>, vector<8x32xf32> -> vector<8x32xf32>
      %97 = vector.extract_strided_slice %94 {offsets = [0, 0], sizes = [8, 8], strides = [1, 1]} : vector<8x32xf32> to vector<8x8xf32>
      %98 = tpu.transpose %97, [1, 0] : vector<8x8xf32> -> vector<8x8xf32>
      %c0_65 = arith.constant 0 : index
      %c0_66 = arith.constant 0 : index
      %c0_67 = arith.constant 0 : index
      %99 = vector.load %arg9[%c0_65, %c0_66, %c0_67] : memref<4x8x8xf32, #tpu.memory_space<vmem>>, vector<1x8x8xf32>
      %100 = vector.shape_cast %99 : vector<1x8x8xf32> to vector<8x8xf32>
      %101 = vector.shape_cast %98 : vector<8x8xf32> to vector<1x8x8xf32>
      tpu.vector_store %arg9[%c0_65, %c0_66, %c0_67], %101 {strides = array<i32>} : memref<4x8x8xf32, #tpu.memory_space<vmem>>, vector<1x8x8xf32>,
      %102 = vector.extract_strided_slice %96 {offsets = [0, 0], sizes = [8, 8], strides = [1, 1]} : vector<8x32xf32> to vector<8x8xf32>
      %c0_68 = arith.constant 0 : index
      %c0_69 = arith.constant 0 : index
      %c0_70 = arith.constant 0 : index
      %103 = vector.load %arg10[%c0_68, %c0_69, %c0_70] : memref<4x8x8xf32, #tpu.memory_space<vmem>>, vector<1x8x8xf32>
      %104 = vector.shape_cast %103 : vector<1x8x8xf32> to vector<8x8xf32>
      %105 = vector.shape_cast %102 : vector<8x8xf32> to vector<1x8x8xf32>
      tpu.vector_store %arg10[%c0_68, %c0_69, %c0_70], %105 {strides = array<i32>} : memref<4x8x8xf32, #tpu.memory_space<vmem>>, vector<1x8x8xf32>,
      %106 = vector.extract_strided_slice %94 {offsets = [0, 8], sizes = [8, 8], strides = [1, 1]} : vector<8x32xf32> to vector<8x8xf32>
      %107 = tpu.transpose %106, [1, 0] : vector<8x8xf32> -> vector<8x8xf32>
      %c1_71 = arith.constant 1 : index
      %c0_72 = arith.constant 0 : index
      %c0_73 = arith.constant 0 : index
      %108 = vector.load %arg9[%c1_71, %c0_72, %c0_73] : memref<4x8x8xf32, #tpu.memory_space<vmem>>, vector<1x8x8xf32>
      %109 = vector.shape_cast %108 : vector<1x8x8xf32> to vector<8x8xf32>
      %110 = vector.shape_cast %107 : vector<8x8xf32> to vector<1x8x8xf32>
      tpu.vector_store %arg9[%c1_71, %c0_72, %c0_73], %110 {strides = array<i32>} : memref<4x8x8xf32, #tpu.memory_space<vmem>>, vector<1x8x8xf32>,
      %111 = vector.extract_strided_slice %96 {offsets = [0, 8], sizes = [8, 8], strides = [1, 1]} : vector<8x32xf32> to vector<8x8xf32>
      %c1_74 = arith.constant 1 : index
      %c0_75 = arith.constant 0 : index
      %c0_76 = arith.constant 0 : index
      %112 = vector.load %arg10[%c1_74, %c0_75, %c0_76] : memref<4x8x8xf32, #tpu.memory_space<vmem>>, vector<1x8x8xf32>
      %113 = vector.shape_cast %112 : vector<1x8x8xf32> to vector<8x8xf32>
      %114 = vector.shape_cast %111 : vector<8x8xf32> to vector<1x8x8xf32>
      tpu.vector_store %arg10[%c1_74, %c0_75, %c0_76], %114 {strides = array<i32>} : memref<4x8x8xf32, #tpu.memory_space<vmem>>, vector<1x8x8xf32>,
      %115 = vector.extract_strided_slice %94 {offsets = [0, 16], sizes = [8, 8], strides = [1, 1]} : vector<8x32xf32> to vector<8x8xf32>
      %116 = tpu.transpose %115, [1, 0] : vector<8x8xf32> -> vector<8x8xf32>
      %c2_77 = arith.constant 2 : index
      %c0_78 = arith.constant 0 : index
      %c0_79 = arith.constant 0 : index
      %117 = vector.load %arg9[%c2_77, %c0_78, %c0_79] : memref<4x8x8xf32, #tpu.memory_space<vmem>>, vector<1x8x8xf32>
      %118 = vector.shape_cast %117 : vector<1x8x8xf32> to vector<8x8xf32>
      %119 = vector.shape_cast %116 : vector<8x8xf32> to vector<1x8x8xf32>
      tpu.vector_store %arg9[%c2_77, %c0_78, %c0_79], %119 {strides = array<i32>} : memref<4x8x8xf32, #tpu.memory_space<vmem>>, vector<1x8x8xf32>,
      %120 = vector.extract_strided_slice %96 {offsets = [0, 16], sizes = [8, 8], strides = [1, 1]} : vector<8x32xf32> to vector<8x8xf32>
      %c2_80 = arith.constant 2 : index
      %c0_81 = arith.constant 0 : index
      %c0_82 = arith.constant 0 : index
      %121 = vector.load %arg10[%c2_80, %c0_81, %c0_82] : memref<4x8x8xf32, #tpu.memory_space<vmem>>, vector<1x8x8xf32>
      %122 = vector.shape_cast %121 : vector<1x8x8xf32> to vector<8x8xf32>
      %123 = vector.shape_cast %120 : vector<8x8xf32> to vector<1x8x8xf32>
      tpu.vector_store %arg10[%c2_80, %c0_81, %c0_82], %123 {strides = array<i32>} : memref<4x8x8xf32, #tpu.memory_space<vmem>>, vector<1x8x8xf32>,
      %124 = vector.extract_strided_slice %94 {offsets = [0, 24], sizes = [8, 8], strides = [1, 1]} : vector<8x32xf32> to vector<8x8xf32>
      %125 = tpu.transpose %124, [1, 0] : vector<8x8xf32> -> vector<8x8xf32>
      %c3_83 = arith.constant 3 : index
      %c0_84 = arith.constant 0 : index
      %c0_85 = arith.constant 0 : index
      %126 = vector.load %arg9[%c3_83, %c0_84, %c0_85] : memref<4x8x8xf32, #tpu.memory_space<vmem>>, vector<1x8x8xf32>
      %127 = vector.shape_cast %126 : vector<1x8x8xf32> to vector<8x8xf32>
      %128 = vector.shape_cast %125 : vector<8x8xf32> to vector<1x8x8xf32>
      tpu.vector_store %arg9[%c3_83, %c0_84, %c0_85], %128 {strides = array<i32>} : memref<4x8x8xf32, #tpu.memory_space<vmem>>, vector<1x8x8xf32>,
      %129 = vector.extract_strided_slice %96 {offsets = [0, 24], sizes = [8, 8], strides = [1, 1]} : vector<8x32xf32> to vector<8x8xf32>
      %c3_86 = arith.constant 3 : index
      %c0_87 = arith.constant 0 : index
      %c0_88 = arith.constant 0 : index
      %130 = vector.load %arg10[%c3_86, %c0_87, %c0_88] : memref<4x8x8xf32, #tpu.memory_space<vmem>>, vector<1x8x8xf32>
      %131 = vector.shape_cast %130 : vector<1x8x8xf32> to vector<8x8xf32>
      %132 = vector.shape_cast %129 : vector<8x8xf32> to vector<1x8x8xf32>
      tpu.vector_store %arg10[%c3_86, %c0_87, %c0_88], %132 {strides = array<i32>} : memref<4x8x8xf32, #tpu.memory_space<vmem>>, vector<1x8x8xf32>,
    } else {
    }
    %c8_i32 = arith.constant 8 : i32
    %3 = arith.muli %arg1, %c8_i32 : i32
    %4 = tpu.assume_multiple %3, 8 : i32
    %c0 = arith.constant 0 : index
    %5 = arith.index_cast %4 : i32 to index
    %c0_1 = arith.constant 0 : index
    %6 = vector.load %arg2[%c0, %5, %c0_1] : memref<1x8x32xf32, #tpu.memory_space<vmem>>, vector<1x8x32xf32>
    %7 = vector.shape_cast %6 : vector<1x8x32xf32> to vector<8x32xf32>
    %c0_2 = arith.constant 0 : index
    %c0_3 = arith.constant 0 : index
    %8 = vector.load %arg3[%c0_2, %c0_3] : memref<32x32xf32, #tpu.memory_space<vmem>>, vector<32x32xf32>
    %cst = arith.constant dense<0.000000e+00> : vector<8x32xf32>
    %9 = tpu.matmul %7, %8, %cst {dimension_numbers = #tpu.dot_dimension_numbers<[1], [0], [0], [1], [0, 0, 1, 1], [], []>} : vector<8x32xf32>, vector<32x32xf32>, vector<8x32xf32> -> vector<8x32xf32>
    %10 = vector.extract_strided_slice %9 {offsets = [0, 0], sizes = [8, 8], strides = [1, 1]} : vector<8x32xf32> to vector<8x8xf32>
    %c0_4 = arith.constant 0 : index
    %c0_5 = arith.constant 0 : index
    %c0_6 = arith.constant 0 : index
    %11 = vector.load %arg9[%c0_4, %c0_5, %c0_6] : memref<4x8x8xf32, #tpu.memory_space<vmem>>, vector<1x8x8xf32>
    %12 = vector.shape_cast %11 : vector<1x8x8xf32> to vector<8x8xf32>
    %cst_7 = arith.constant dense<0.000000e+00> : vector<8x8xf32>
    %13 = tpu.matmul %10, %12, %cst_7 {dimension_numbers = #tpu.dot_dimension_numbers<[1], [0], [0], [1], [0, 0, 1, 1], [], []>} : vector<8x8xf32>, vector<8x8xf32>, vector<8x8xf32> -> vector<8x8xf32>
    %cst_8 = arith.constant dense<0xFF800000> : vector<8xf32>
    %14 = vector.multi_reduction <maximumf>, %13, %cst_8 [1] : vector<8x8xf32> to vector<8xf32>
    %15 = vector.shape_cast %14 : vector<8xf32> to vector<8x1xf32>
    %16 = vector.broadcast %15 : vector<8x1xf32> to vector<8x8xf32>
    %17 = arith.subf %13, %16 : vector<8x8xf32>
    %18 = math.exp %17 : vector<8x8xf32>
    %cst_9 = arith.constant dense<0.000000e+00> : vector<8xf32>
    %19 = vector.multi_reduction <add>, %18, %cst_9 [1] : vector<8x8xf32> to vector<8xf32>
    %20 = vector.shape_cast %19 : vector<8xf32> to vector<8x1xf32>
    %c0_10 = arith.constant 0 : index
    %c0_11 = arith.constant 0 : index
    %c0_12 = arith.constant 0 : index
    %21 = vector.load %arg10[%c0_10, %c0_11, %c0_12] : memref<4x8x8xf32, #tpu.memory_space<vmem>>, vector<1x8x8xf32>
    %22 = vector.shape_cast %21 : vector<1x8x8xf32> to vector<8x8xf32>
    %cst_13 = arith.constant dense<0.000000e+00> : vector<8x8xf32>
    %23 = tpu.matmul %18, %22, %cst_13 {dimension_numbers = #tpu.dot_dimension_numbers<[1], [0], [0], [1], [0, 0, 1, 1], [], []>} : vector<8x8xf32>, vector<8x8xf32>, vector<8x8xf32> -> vector<8x8xf32>
    %24 = tpu.reciprocal %20 : vector<8x1xf32> -> vector<8x1xf32>
    %25 = vector.broadcast %24 : vector<8x1xf32> to vector<8x8xf32>
    %26 = arith.mulf %23, %25 : vector<8x8xf32>
    %c0_14 = arith.constant 0 : index
    %c0_15 = arith.constant 0 : index
    %27 = vector.load %arg11[%c0_14, %c0_15] : memref<8x32xf32, #tpu.memory_space<vmem>>, vector<8x8xf32>
    tpu.vector_store %arg11[%c0_14, %c0_15], %26 {strides = array<i32>} : memref<8x32xf32, #tpu.memory_space<vmem>>, vector<8x8xf32>,
    %28 = vector.extract_strided_slice %9 {offsets = [0, 8], sizes = [8, 8], strides = [1, 1]} : vector<8x32xf32> to vector<8x8xf32>
    %c1 = arith.constant 1 : index
    %c0_16 = arith.constant 0 : index
    %c0_17 = arith.constant 0 : index
    %29 = vector.load %arg9[%c1, %c0_16, %c0_17] : memref<4x8x8xf32, #tpu.memory_space<vmem>>, vector<1x8x8xf32>
    %30 = vector.shape_cast %29 : vector<1x8x8xf32> to vector<8x8xf32>
    %cst_18 = arith.constant dense<0.000000e+00> : vector<8x8xf32>
    %31 = tpu.matmul %28, %30, %cst_18 {dimension_numbers = #tpu.dot_dimension_numbers<[1], [0], [0], [1], [0, 0, 1, 1], [], []>} : vector<8x8xf32>, vector<8x8xf32>, vector<8x8xf32> -> vector<8x8xf32>
    %cst_19 = arith.constant dense<0xFF800000> : vector<8xf32>
    %32 = vector.multi_reduction <maximumf>, %31, %cst_19 [1] : vector<8x8xf32> to vector<8xf32>
    %33 = vector.shape_cast %32 : vector<8xf32> to vector<8x1xf32>
    %34 = vector.broadcast %33 : vector<8x1xf32> to vector<8x8xf32>
    %35 = arith.subf %31, %34 : vector<8x8xf32>
    %36 = math.exp %35 : vector<8x8xf32>
    %cst_20 = arith.constant dense<0.000000e+00> : vector<8xf32>
    %37 = vector.multi_reduction <add>, %36, %cst_20 [1] : vector<8x8xf32> to vector<8xf32>
    %38 = vector.shape_cast %37 : vector<8xf32> to vector<8x1xf32>
    %c1_21 = arith.constant 1 : index
    %c0_22 = arith.constant 0 : index
    %c0_23 = arith.constant 0 : index
    %39 = vector.load %arg10[%c1_21, %c0_22, %c0_23] : memref<4x8x8xf32, #tpu.memory_space<vmem>>, vector<1x8x8xf32>
    %40 = vector.shape_cast %39 : vector<1x8x8xf32> to vector<8x8xf32>
    %cst_24 = arith.constant dense<0.000000e+00> : vector<8x8xf32>
    %41 = tpu.matmul %36, %40, %cst_24 {dimension_numbers = #tpu.dot_dimension_numbers<[1], [0], [0], [1], [0, 0, 1, 1], [], []>} : vector<8x8xf32>, vector<8x8xf32>, vector<8x8xf32> -> vector<8x8xf32>
    %42 = tpu.reciprocal %38 : vector<8x1xf32> -> vector<8x1xf32>
    %43 = vector.broadcast %42 : vector<8x1xf32> to vector<8x8xf32>
    %44 = arith.mulf %41, %43 : vector<8x8xf32>
    %c0_25 = arith.constant 0 : index
    %c8 = arith.constant 8 : index
    %45 = vector.load %arg11[%c0_25, %c8] : memref<8x32xf32, #tpu.memory_space<vmem>>, vector<8x8xf32>
    tpu.vector_store %arg11[%c0_25, %c8], %44 {strides = array<i32>} : memref<8x32xf32, #tpu.memory_space<vmem>>, vector<8x8xf32>,
    %46 = vector.extract_strided_slice %9 {offsets = [0, 16], sizes = [8, 8], strides = [1, 1]} : vector<8x32xf32> to vector<8x8xf32>
    %c2 = arith.constant 2 : index
    %c0_26 = arith.constant 0 : index
    %c0_27 = arith.constant 0 : index
    %47 = vector.load %arg9[%c2, %c0_26, %c0_27] : memref<4x8x8xf32, #tpu.memory_space<vmem>>, vector<1x8x8xf32>
    %48 = vector.shape_cast %47 : vector<1x8x8xf32> to vector<8x8xf32>
    %cst_28 = arith.constant dense<0.000000e+00> : vector<8x8xf32>
    %49 = tpu.matmul %46, %48, %cst_28 {dimension_numbers = #tpu.dot_dimension_numbers<[1], [0], [0], [1], [0, 0, 1, 1], [], []>} : vector<8x8xf32>, vector<8x8xf32>, vector<8x8xf32> -> vector<8x8xf32>
    %cst_29 = arith.constant dense<0xFF800000> : vector<8xf32>
    %50 = vector.multi_reduction <maximumf>, %49, %cst_29 [1] : vector<8x8xf32> to vector<8xf32>
    %51 = vector.shape_cast %50 : vector<8xf32> to vector<8x1xf32>
    %52 = vector.broadcast %51 : vector<8x1xf32> to vector<8x8xf32>
    %53 = arith.subf %49, %52 : vector<8x8xf32>
    %54 = math.exp %53 : vector<8x8xf32>
    %cst_30 = arith.constant dense<0.000000e+00> : vector<8xf32>
    %55 = vector.multi_reduction <add>, %54, %cst_30 [1] : vector<8x8xf32> to vector<8xf32>
    %56 = vector.shape_cast %55 : vector<8xf32> to vector<8x1xf32>
    %c2_31 = arith.constant 2 : index
    %c0_32 = arith.constant 0 : index
    %c0_33 = arith.constant 0 : index
    %57 = vector.load %arg10[%c2_31, %c0_32, %c0_33] : memref<4x8x8xf32, #tpu.memory_space<vmem>>, vector<1x8x8xf32>
    %58 = vector.shape_cast %57 : vector<1x8x8xf32> to vector<8x8xf32>
    %cst_34 = arith.constant dense<0.000000e+00> : vector<8x8xf32>
    %59 = tpu.matmul %54, %58, %cst_34 {dimension_numbers = #tpu.dot_dimension_numbers<[1], [0], [0], [1], [0, 0, 1, 1], [], []>} : vector<8x8xf32>, vector<8x8xf32>, vector<8x8xf32> -> vector<8x8xf32>
    %60 = tpu.reciprocal %56 : vector<8x1xf32> -> vector<8x1xf32>
    %61 = vector.broadcast %60 : vector<8x1xf32> to vector<8x8xf32>
    %62 = arith.mulf %59, %61 : vector<8x8xf32>
    %c0_35 = arith.constant 0 : index
    %c16 = arith.constant 16 : index
    %63 = vector.load %arg11[%c0_35, %c16] : memref<8x32xf32, #tpu.memory_space<vmem>>, vector<8x8xf32>
    tpu.vector_store %arg11[%c0_35, %c16], %62 {strides = array<i32>} : memref<8x32xf32, #tpu.memory_space<vmem>>, vector<8x8xf32>,
    %64 = vector.extract_strided_slice %9 {offsets = [0, 24], sizes = [8, 8], strides = [1, 1]} : vector<8x32xf32> to vector<8x8xf32>
    %c3 = arith.constant 3 : index
    %c0_36 = arith.constant 0 : index
    %c0_37 = arith.constant 0 : index
    %65 = vector.load %arg9[%c3, %c0_36, %c0_37] : memref<4x8x8xf32, #tpu.memory_space<vmem>>, vector<1x8x8xf32>
    %66 = vector.shape_cast %65 : vector<1x8x8xf32> to vector<8x8xf32>
    %cst_38 = arith.constant dense<0.000000e+00> : vector<8x8xf32>
    %67 = tpu.matmul %64, %66, %cst_38 {dimension_numbers = #tpu.dot_dimension_numbers<[1], [0], [0], [1], [0, 0, 1, 1], [], []>} : vector<8x8xf32>, vector<8x8xf32>, vector<8x8xf32> -> vector<8x8xf32>
    %cst_39 = arith.constant dense<0xFF800000> : vector<8xf32>
    %68 = vector.multi_reduction <maximumf>, %67, %cst_39 [1] : vector<8x8xf32> to vector<8xf32>
    %69 = vector.shape_cast %68 : vector<8xf32> to vector<8x1xf32>
    %70 = vector.broadcast %69 : vector<8x1xf32> to vector<8x8xf32>
    %71 = arith.subf %67, %70 : vector<8x8xf32>
    %72 = math.exp %71 : vector<8x8xf32>
    %cst_40 = arith.constant dense<0.000000e+00> : vector<8xf32>
    %73 = vector.multi_reduction <add>, %72, %cst_40 [1] : vector<8x8xf32> to vector<8xf32>
    %74 = vector.shape_cast %73 : vector<8xf32> to vector<8x1xf32>
    %c3_41 = arith.constant 3 : index
    %c0_42 = arith.constant 0 : index
    %c0_43 = arith.constant 0 : index
    %75 = vector.load %arg10[%c3_41, %c0_42, %c0_43] : memref<4x8x8xf32, #tpu.memory_space<vmem>>, vector<1x8x8xf32>
    %76 = vector.shape_cast %75 : vector<1x8x8xf32> to vector<8x8xf32>
    %cst_44 = arith.constant dense<0.000000e+00> : vector<8x8xf32>
    %77 = tpu.matmul %72, %76, %cst_44 {dimension_numbers = #tpu.dot_dimension_numbers<[1], [0], [0], [1], [0, 0, 1, 1], [], []>} : vector<8x8xf32>, vector<8x8xf32>, vector<8x8xf32> -> vector<8x8xf32>
    %78 = tpu.reciprocal %74 : vector<8x1xf32> -> vector<8x1xf32>
    %79 = vector.broadcast %78 : vector<8x1xf32> to vector<8x8xf32>
    %80 = arith.mulf %77, %79 : vector<8x8xf32>
    %c0_45 = arith.constant 0 : index
    %c24 = arith.constant 24 : index
    %81 = vector.load %arg11[%c0_45, %c24] : memref<8x32xf32, #tpu.memory_space<vmem>>, vector<8x8xf32>
    tpu.vector_store %arg11[%c0_45, %c24], %80 {strides = array<i32>} : memref<8x32xf32, #tpu.memory_space<vmem>>, vector<8x8xf32>,
    %c0_46 = arith.constant 0 : index
    %c0_47 = arith.constant 0 : index
    %82 = vector.load %arg11[%c0_46, %c0_47] : memref<8x32xf32, #tpu.memory_space<vmem>>, vector<8x32xf32>
    %c0_48 = arith.constant 0 : index
    %c0_49 = arith.constant 0 : index
    %83 = vector.load %arg6[%c0_48, %c0_49] : memref<32x32xf32, #tpu.memory_space<vmem>>, vector<32x32xf32>
    %cst_50 = arith.constant dense<0.000000e+00> : vector<8x32xf32>
    %84 = tpu.matmul %82, %83, %cst_50 {dimension_numbers = #tpu.dot_dimension_numbers<[1], [0], [0], [1], [0, 0, 1, 1], [], []>} : vector<8x32xf32>, vector<32x32xf32>, vector<8x32xf32> -> vector<8x32xf32>
    %c0_51 = arith.constant 0 : index
    %c0_52 = arith.constant 0 : index
    %85 = vector.load %arg7[%c0_51, %c0_52] : memref<1x32xf32, #tpu.memory_space<vmem>>, vector<1x32xf32>
    %86 = vector.broadcast %85 : vector<1x32xf32> to vector<8x32xf32>
    %87 = arith.addf %84, %86 : vector<8x32xf32>
    %c0_53 = arith.constant 0 : index
    %c0_54 = arith.constant 0 : index
    %c0_55 = arith.constant 0 : index
    %88 = vector.load %arg8[%c0_53, %c0_54, %c0_55] : memref<1x8x32xf32, #tpu.memory_space<vmem>>, vector<1x8x32xf32>
    %89 = vector.shape_cast %88 : vector<1x8x32xf32> to vector<8x32xf32>
    %90 = vector.shape_cast %87 : vector<8x32xf32> to vector<1x8x32xf32>
    tpu.vector_store %arg8[%c0_53, %c0_54, %c0_55], %90 {strides = array<i32>} : memref<1x8x32xf32, #tpu.memory_space<vmem>>, vector<1x8x32xf32>,
    return
  }
  func.func @transform_0(%arg0: i32, %arg1: i32) -> (i32, i32, i32) {
    %c0_i32 = arith.constant 0 : i32
    %c0_i32_0 = arith.constant 0 : i32
    %c0_i32_1 = arith.constant 0 : i32
    return %arg0, %c0_i32, %c0_i32_0 : i32, i32, i32
  }
  func.func @transform_1(%arg0: i32, %arg1: i32) -> (i32, i32) {
    %c0_i32 = arith.constant 0 : i32
    %c0_i32_0 = arith.constant 0 : i32
    %c0_i32_1 = arith.constant 0 : i32
    return %c0_i32, %c0_i32_0 : i32, i32
  }
  func.func @transform_2(%arg0: i32, %arg1: i32) -> (i32, i32) {
    %c0_i32 = arith.constant 0 : i32
    %c0_i32_0 = arith.constant 0 : i32
    %c0_i32_1 = arith.constant 0 : i32
    return %c0_i32, %c0_i32_0 : i32, i32
  }
  func.func @transform_3(%arg0: i32, %arg1: i32) -> (i32, i32) {
    %c0_i32 = arith.constant 0 : i32
    %c0_i32_0 = arith.constant 0 : i32
    %c0_i32_1 = arith.constant 0 : i32
    return %c0_i32, %c0_i32_0 : i32, i32
  }
  func.func @transform_4(%arg0: i32, %arg1: i32) -> (i32, i32) {
    %c0_i32 = arith.constant 0 : i32
    %c0_i32_0 = arith.constant 0 : i32
    %c0_i32_1 = arith.constant 0 : i32
    return %c0_i32, %c0_i32_0 : i32, i32
  }
  func.func @transform_5(%arg0: i32, %arg1: i32) -> (i32, i32) {
    %c0_i32 = arith.constant 0 : i32
    %c0_i32_0 = arith.constant 0 : i32
    %c0_i32_1 = arith.constant 0 : i32
    return %c0_i32, %c0_i32_0 : i32, i32
  }
  func.func @transform_6(%arg0: i32, %arg1: i32) -> (i32, i32, i32) {
    %c0_i32 = arith.constant 0 : i32
    %c0_i32_0 = arith.constant 0 : i32
    return %arg0, %arg1, %c0_i32 : i32, i32, i32
  }
}

</mosaic_0001>

<llo_original>
// kernel: tpu_custom_call.1
$region0: #{tpu_custom_call.1}
  #allocation0 [shape = 'u32[]', space=smem, size = 0x4, offset = 0x4, fixed_abs, tag = 'smem constant byte address 0x4 - core index']
  #allocation1 [shape = 'u32[144,128]{1,0:T(1,128)}', space=vmem, size = 0x12000, scoped, tag = 'internal scratch']
  #allocation2 [shape = 'f32[4,8,8]{2,1,0:T(8,128)}', space=vmem, size = 0x4000, scoped, tag = 'scratch operand']
  #allocation3 [shape = 'f32[4,8,8]{2,1,0:T(8,128)}', space=vmem, size = 0x4000, scoped, tag = 'scratch operand']
  #allocation4 [shape = 'f32[8,32]{1,0:T(8,128)}', space=vmem, size = 0x1000, scoped, tag = 'scratch operand']
  %s0 = inlined_call_operand.hbm [shape: f32[2,8,32], index: 0, kind: input, shape index: {}]
  %s1 = inlined_call_operand.hbm [shape: f32[32,32], index: 1, kind: input, shape index: {}]
  %s2 = inlined_call_operand.hbm [shape: f32[32,32], index: 2, kind: input, shape index: {}]
  %s3 = inlined_call_operand.hbm [shape: f32[32,32], index: 3, kind: input, shape index: {}]
  %s4 = inlined_call_operand.hbm [shape: f32[32,32], index: 4, kind: input, shape index: {}]
  %s5 = inlined_call_operand.vmem [shape: f32[1,32], index: 5, kind: input, shape index: {}]
  %s6 = inlined_call_operand.hbm [shape: f32[2,8,32], index: 6, kind: output, shape index: {}]
  %s7 = sld [smem:[#allocation0]]
  $region81: #{tpu_custom_call.1} parent=0
    _
  %s9 = ssub.s32 1, %s7
  %s10 = scalar_select 0, %s9, %s7
  $region1: #{tpu_custom_call.1} parent=0
    #allocation5 [shape = 'u8[8192]{0}', space=vmem, size = 0x2000, scoped, tag = 'input window, operand 0']
    #allocation6 [shape = 's32[2]{0}', space=sflag, size = 0x8, scoped, tag = 'scoped memory for tpu_custom_call.1']
    #allocation7 [shape = 's32[2]{0}', space=sflag, size = 0x8, scoped, tag = 'scoped memory for tpu_custom_call.1']
    #allocation8 [shape = 'u8[16384]{0}', space=vmem, size = 0x4000, scoped, tag = 'input window, operand 1, single buffered']
    #allocation9 [shape = 's32[1]{0}', space=sflag, size = 0x4, scoped, tag = 'scoped memory for tpu_custom_call.1']
    #allocation10 [shape = 'u8[16384]{0}', space=vmem, size = 0x4000, scoped, tag = 'input window, operand 2, single buffered']
    #allocation11 [shape = 'u8[16384]{0}', space=vmem, size = 0x4000, scoped, tag = 'input window, operand 3, single buffered']
    #allocation12 [shape = 's32[1]{0}', space=sflag, size = 0x4, scoped, tag = 'scoped memory for tpu_custom_call.1']
    #allocation13 [shape = 'u8[16384]{0}', space=vmem, size = 0x4000, scoped, tag = 'input window, operand 4, single buffered']
    #allocation14 [shape = 'u8[8192]{0}', space=vmem, size = 0x2000, scoped, tag = 'output window, operand 0']
    %11 = vsyncpa [#allocation6], 0
    %s12 = scalar_lea.sflag [#allocation6], 1
    %13 = vsyncpa %s12, 0
    %14 = vsyncpa [#allocation9], 0
    %15 = vsyncpa [#allocation12], 0
    %16 = vsyncpa [#allocation7], 0
    %s17 = scalar_lea.sflag [#allocation7], 1
    %18 = vsyncpa %s17, 0
    loop: start=0, step=1, limit=4
    $region2: #{tpu_custom_call.1} parent=1 // loop_pre_header
      _
    $region3: #{tpu_custom_call.1} parent=1 // loop_header
      %s20 = sphi 0, %s24
      %p21 = scmp.ge.s32.totalorder %s20, 4
      %s27 = sphi 0, %s39
      %s28 = sphi 0, %s35
      %s29 = sphi 0, %s27
      %s30 = sphi 0, %s28
      %s31 = sphi 0, %s29
      %s32 = sphi 0, %s30
      %s42 = sphi 0, %s44
      %s45 = sphi 0, %s42
      %s46 = sphi 0, %s45
      %s62 = sphi 0, %s46
      %s66 = sphi 0, %s66
      %s68 = sphi 0, %s66
      %s69 = sphi 0, %s68
      %s83 = sphi 0, %s69
      %s87 = sphi 0, %s87
      %s89 = sphi 0, %s87
      %s90 = sphi 0, %s89
      %s104 = sphi 0, %s90
      %s108 = sphi 0, %s108
      %s110 = sphi 0, %s108
      %s111 = sphi 0, %s110
      %s125 = sphi 0, %s111
      %s129 = sphi 0, %s129
      %s131 = sphi 0, %s129
      %s132 = sphi 0, %s131
      %s146 = sphi 0, %s132
      %s150 = sphi 0, %s150
      %s152 = sphi 0, %s150
      %s153 = sphi 0, %s152
      %s167 = sphi 0, %s153
      %s175 = sphi 0, %s177
      %s178 = sphi 0, %s175
      %s179 = sphi 0, %s178
      %s195 = sphi 0, %s179
    $region4: #{tpu_custom_call.1} parent=1 // loop_header_branch
      %23 = sbr.rel (%p21) target = $region8
    $region5: #{tpu_custom_call.1} parent=1 // loop_body
      %s25 = ssub.s32 %s20, 1
      %s26 = ssub.s32 %s20, 2
      %s33 = sadd.s32 1, %s28
      %p34 = scmp.ge.s32.totalorder %s33, 1
      %s35 = scalar_select %p34, 0, %s33
      %s36 = sadd.s32 1, %s27
      %s37 = scalar_select %p34, %s36, %s27
      %p38 = scmp.ge.s32.totalorder %s37, 2
      %s39 = scalar_select %p38, 0, %s37
      %s40 = ssub.s32 %s27, %s39
      %p41 = scmp.eq.s32.totalorder %s40, 0
      %s43 = sadd.s32 %s42, 1
      %s44 = scalar_select %p41, %s42, %s43
      %p47 = pneg %p41
      %p48 = scmp.eq.s32.totalorder %s20, 1
      %p49 = por %p47, %p48
      %p50 = scmp.ne.s32.totalorder %s42, %s45
      %p51 = scmp.eq.s32.totalorder %s20, 0
      %p52 = por %p50, %p51
      %p53 = scmp.ne.s32.totalorder %s42, %s45
      %p54 = scmp.eq.s32.totalorder %s25, 1
      %p55 = por %p53, %p54
      %p56 = scmp.ne.s32.totalorder %s45, %s46
      %p57 = scmp.eq.s32.totalorder %s25, 0
      %p58 = por %p56, %p57
      %p59 = scmp.ne.s32.totalorder %s45, %s46
      %p60 = scmp.eq.s32.totalorder %s26, 1
      %p61 = por %p59, %p60
      %p63 = scmp.ne.s32.totalorder %s46, %s62
      %p64 = scmp.eq.s32.totalorder %s26, 0
      %p65 = por %p63, %p64
      %s67 = sadd.s32 %s66, 1
      %p70 = scmp.eq.s32.totalorder %s20, 1
      %p71 = scmp.ne.s32.totalorder %s66, %s68
      %p72 = scmp.eq.s32.totalorder %s20, 0
      %p73 = por %p71, %p72
      %p74 = scmp.ne.s32.totalorder %s66, %s68
      %p75 = scmp.eq.s32.totalorder %s25, 1
      %p76 = por %p74, %p75
      %p77 = scmp.ne.s32.totalorder %s68, %s69
      %p78 = scmp.eq.s32.totalorder %s25, 0
      %p79 = por %p77, %p78
      %p80 = scmp.ne.s32.totalorder %s68, %s69
      %p81 = scmp.eq.s32.totalorder %s26, 1
      %p82 = por %p80, %p81
      %p84 = scmp.ne.s32.totalorder %s69, %s83
      %p85 = scmp.eq.s32.totalorder %s26, 0
      %p86 = por %p84, %p85
      %s88 = sadd.s32 %s87, 1
      %p91 = scmp.eq.s32.totalorder %s20, 1
      %p92 = scmp.ne.s32.totalorder %s87, %s89
      %p93 = scmp.eq.s32.totalorder %s20, 0
      %p94 = por %p92, %p93
      %p95 = scmp.ne.s32.totalorder %s87, %s89
      %p96 = scmp.eq.s32.totalorder %s25, 1
      %p97 = por %p95, %p96
      %p98 = scmp.ne.s32.totalorder %s89, %s90
      %p99 = scmp.eq.s32.totalorder %s25, 0
      %p100 = por %p98, %p99
      %p101 = scmp.ne.s32.totalorder %s89, %s90
      %p102 = scmp.eq.s32.totalorder %s26, 1
      %p103 = por %p101, %p102
      %p105 = scmp.ne.s32.totalorder %s90, %s104
      %p106 = scmp.eq.s32.totalorder %s26, 0
      %p107 = por %p105, %p106
      %s109 = sadd.s32 %s108, 1
      %p112 = scmp.eq.s32.totalorder %s20, 1
      %p113 = scmp.ne.s32.totalorder %s108, %s110
      %p114 = scmp.eq.s32.totalorder %s20, 0
      %p115 = por %p113, %p114
      %p116 = scmp.ne.s32.totalorder %s108, %s110
      %p117 = scmp.eq.s32.totalorder %s25, 1
      %p118 = por %p116, %p117
      %p119 = scmp.ne.s32.totalorder %s110, %s111
      %p120 = scmp.eq.s32.totalorder %s25, 0
      %p121 = por %p119, %p120
      %p122 = scmp.ne.s32.totalorder %s110, %s111
      %p123 = scmp.eq.s32.totalorder %s26, 1
      %p124 = por %p122, %p123
      %p126 = scmp.ne.s32.totalorder %s111, %s125
      %p127 = scmp.eq.s32.totalorder %s26, 0
      %p128 = por %p126, %p127
      %s130 = sadd.s32 %s129, 1
      %p133 = scmp.eq.s32.totalorder %s20, 1
      %p134 = scmp.ne.s32.totalorder %s129, %s131
      %p135 = scmp.eq.s32.totalorder %s20, 0
      %p136 = por %p134, %p135
      %p137 = scmp.ne.s32.totalorder %s129, %s131
      %p138 = scmp.eq.s32.totalorder %s25, 1
      %p139 = por %p137, %p138
      %p140 = scmp.ne.s32.totalorder %s131, %s132
      %p141 = scmp.eq.s32.totalorder %s25, 0
      %p142 = por %p140, %p141
      %p143 = scmp.ne.s32.totalorder %s131, %s132
      %p144 = scmp.eq.s32.totalorder %s26, 1
      %p145 = por %p143, %p144
      %p147 = scmp.ne.s32.totalorder %s132, %s146
      %p148 = scmp.eq.s32.totalorder %s26, 0
      %p149 = por %p147, %p148
      %s151 = sadd.s32 %s150, 1
      %p154 = scmp.eq.s32.totalorder %s20, 1
      %p155 = scmp.ne.s32.totalorder %s150, %s152
      %p156 = scmp.eq.s32.totalorder %s20, 0
      %p157 = por %p155, %p156
      %p158 = scmp.ne.s32.totalorder %s150, %s152
      %p159 = scmp.eq.s32.totalorder %s25, 1
      %p160 = por %p158, %p159
      %p161 = scmp.ne.s32.totalorder %s152, %s153
      %p162 = scmp.eq.s32.totalorder %s25, 0
      %p163 = por %p161, %p162
      %p164 = scmp.ne.s32.totalorder %s152, %s153
      %p165 = scmp.eq.s32.totalorder %s26, 1
      %p166 = por %p164, %p165
      %p168 = scmp.ne.s32.totalorder %s153, %s167
      %p169 = scmp.eq.s32.totalorder %s26, 0
      %p170 = por %p168, %p169
      %s171 = ssub.s32 %s27, %s39
      %s172 = ssub.s32 %s28, %s35
      %s173 = sor.u32 %s171, %s172
      %p174 = scmp.eq.s32.totalorder %s173, 0
      %s176 = sadd.s32 %s175, 1
      %s177 = scalar_select %p174, %s175, %s176
      %p180 = pneg %p174
      %p181 = scmp.eq.s32.totalorder %s20, 1
      %p182 = por %p180, %p181
      %p183 = scmp.ne.s32.totalorder %s175, %s178
      %p184 = scmp.eq.s32.totalorder %s20, 0
      %p185 = por %p183, %p184
      %p186 = scmp.ne.s32.totalorder %s175, %s178
      %p187 = scmp.eq.s32.totalorder %s25, 1
      %p188 = por %p186, %p187
      %p189 = scmp.ne.s32.totalorder %s178, %s179
      %p190 = scmp.eq.s32.totalorder %s25, 0
      %p191 = por %p189, %p190
      %p192 = scmp.ne.s32.totalorder %s178, %s179
      %p193 = scmp.eq.s32.totalorder %s26, 1
      %p194 = por %p192, %p193
      %p196 = scmp.ne.s32.totalorder %s179, %s195
      %p197 = scmp.eq.s32.totalorder %s26, 0
      %p198 = por %p196, %p197
      %p199 = scmp.le.s32.totalorder 1, %s20
      %p200 = scmp.lt.s32.totalorder %s20, 3
      %p201 = pnand %p199, %p200
      %p202 = pneg %p201
      // Predicated region
      $region9: #{tpu_custom_call.1} parent=5 // pred_check
        _
      $region10: #{tpu_custom_call.1} parent=5 // pred_check_branch
        %204 = sbr.rel (%p201) target = $region12
      $region11: #{tpu_custom_call.1} parent=5 // pred_region
        %s205 = ssub.s32 %s20, 1
        // Predicated region
        $region13: #{tpu_custom_call.1} parent=11 // pred_check
          %p206 = pneg %p79
        $region14: #{tpu_custom_call.1} parent=11 // pred_check_branch
          %208 = sbr.rel (%p206) target = $region16
        $region15: #{tpu_custom_call.1} parent=11 // pred_region
          %s210 = ssub.s32 512, 512
          %211 = vsyncadd [#allocation9], %s210
          %s212 = sshll.u32 [#allocation8], 4
          %s213 = int_to_ptr.vmem [resolvable:$true] %s212
          %218 = dma.hbm_to_vmem [thread:$0]  %s1, 512, %s213, [#allocation9], 128, 128, 8
        $region16: #{tpu_custom_call.1} parent=11 // pred_fallthru
          _
        // Predicated region
        $region17: #{tpu_custom_call.1} parent=11 // pred_check
          %p219 = pneg %p100
        $region18: #{tpu_custom_call.1} parent=11 // pred_check_branch
          %221 = sbr.rel (%p219) target = $region20
        $region19: #{tpu_custom_call.1} parent=11 // pred_region
          %s223 = ssub.s32 512, 512
          %224 = vsyncadd [#allocation9], %s223
          %s225 = sshll.u32 [#allocation10], 4
          %s226 = int_to_ptr.vmem [resolvable:$true] %s225
          %231 = dma.hbm_to_vmem [thread:$0]  %s2, 512, %s226, [#allocation9], 128, 128, 8
        $region20: #{tpu_custom_call.1} parent=11 // pred_fallthru
          _
        // Predicated region
        $region21: #{tpu_custom_call.1} parent=11 // pred_check
          %p232 = pneg %p121
        $region22: #{tpu_custom_call.1} parent=11 // pred_check_branch
          %234 = sbr.rel (%p232) target = $region24
        $region23: #{tpu_custom_call.1} parent=11 // pred_region
          %s236 = ssub.s32 512, 512
          %237 = vsyncadd [#allocation12], %s236
          %s238 = sshll.u32 [#allocation11], 4
          %s239 = int_to_ptr.vmem [resolvable:$true] %s238
          %244 = dma.hbm_to_vmem [thread:$0]  %s3, 512, %s239, [#allocation12], 128, 128, 8
        $region24: #{tpu_custom_call.1} parent=11 // pred_fallthru
          _
        // Predicated region
        $region25: #{tpu_custom_call.1} parent=11 // pred_check
          %p245 = pneg %p142
        $region26: #{tpu_custom_call.1} parent=11 // pred_check_branch
          %247 = sbr.rel (%p245) target = $region28
        $region27: #{tpu_custom_call.1} parent=11 // pred_region
          %s249 = ssub.s32 512, 512
          %250 = vsyncadd [#allocation12], %s249
          %s251 = sshll.u32 [#allocation13], 4
          %s252 = int_to_ptr.vmem [resolvable:$true] %s251
          %257 = dma.hbm_to_vmem [thread:$0]  %s4, 512, %s252, [#allocation12], 128, 128, 8
        $region28: #{tpu_custom_call.1} parent=11 // pred_fallthru
          _
        // Predicated region
        $region29: #{tpu_custom_call.1} parent=11 // pred_check
          %p258 = pneg %p163
        $region30: #{tpu_custom_call.1} parent=11 // pred_check_branch
          %260 = sbr.rel (%p258) target = $region32
        $region31: #{tpu_custom_call.1} parent=11 // pred_region
          _
        $region32: #{tpu_custom_call.1} parent=11 // pred_fallthru
          _
      $region12: #{tpu_custom_call.1} parent=5 // pred_fallthru
        _
      %p261 = scmp.lt.s32.totalorder %s20, 2
      // Predicated region
      $region33: #{tpu_custom_call.1} parent=5 // pred_check
        %p262 = pneg %p261
      $region34: #{tpu_custom_call.1} parent=5 // pred_check_branch
        %264 = sbr.rel (%p262) target = $region36
      $region35: #{tpu_custom_call.1} parent=5 // pred_region
        // Predicated region
        $region37: #{tpu_custom_call.1} parent=35 // pred_check
          %p265 = pneg %p52
        $region38: #{tpu_custom_call.1} parent=35 // pred_check_branch
          %267 = sbr.rel (%p265) target = $region40
        $region39: #{tpu_custom_call.1} parent=35 // pred_region
          %s268 = sand.u32 %s42, 1
          %s269 = scalar_lea.sflag [#allocation6], %s268
          %s270 = sand.u32 %s42, 1
          %s271 = smul.addr %s270, 8
          %s272 = scalar_lea.vmem [#allocation5], %s271
          %s274 = ssub.s32 128, 128
          %275 = vsyncadd %s269, %s274
          %s276 = smul.addr %s27, 128
          %s277 = scalar_lea.hbm %s0, %s276
          %s279 = sshll.u32 %s272, 4
          %s280 = int_to_ptr.vmem [resolvable:$true] %s279
          %282 = dma.hbm_to_vmem [thread:$0]  %s277, 128, %s280, %s269
        $region40: #{tpu_custom_call.1} parent=35 // pred_fallthru
          _
      $region36: #{tpu_custom_call.1} parent=5 // pred_fallthru
        _
      %p283 = scmp.le.s32.totalorder 1, %s20
      %p284 = scmp.lt.s32.totalorder %s20, 3
      %p285 = pnand %p283, %p284
      %p286 = pneg %p285
      // Predicated region
      $region41: #{tpu_custom_call.1} parent=5 // pred_check
        _
      $region42: #{tpu_custom_call.1} parent=5 // pred_check_branch
        %288 = sbr.rel (%p285) target = $region44
      $region43: #{tpu_custom_call.1} parent=5 // pred_region
        %s289 = ssub.s32 %s20, 1
        %s290 = sand.u32 %s45, 1
        %s291 = scalar_lea.sflag [#allocation6], %s290
        %s292 = sand.u32 %s45, 1
        %s293 = smul.addr %s292, 8
        %s294 = scalar_lea.vmem [#allocation5], %s293
        // Predicated region
        $region45: #{tpu_custom_call.1} parent=43 // pred_check
          %p295 = pneg %p58
        $region46: #{tpu_custom_call.1} parent=43 // pred_check_branch
          %297 = sbr.rel (%p295) target = $region48
        $region47: #{tpu_custom_call.1} parent=43 // pred_region
          %298 = dma.done %s291, 128
        $region48: #{tpu_custom_call.1} parent=43 // pred_fallthru
          _
        // Predicated region
        $region49: #{tpu_custom_call.1} parent=43 // pred_check
          %p299 = pneg %p79
        $region50: #{tpu_custom_call.1} parent=43 // pred_check_branch
          %301 = sbr.rel (%p299) target = $region52
        $region51: #{tpu_custom_call.1} parent=43 // pred_region
          %302 = dma.done [#allocation9], 512
        $region52: #{tpu_custom_call.1} parent=43 // pred_fallthru
          _
        // Predicated region
        $region53: #{tpu_custom_call.1} parent=43 // pred_check
          %p303 = pneg %p100
        $region54: #{tpu_custom_call.1} parent=43 // pred_check_branch
          %305 = sbr.rel (%p303) target = $region56
        $region55: #{tpu_custom_call.1} parent=43 // pred_region
          %306 = dma.done [#allocation9], 512
        $region56: #{tpu_custom_call.1} parent=43 // pred_fallthru
          _
        // Predicated region
        $region57: #{tpu_custom_call.1} parent=43 // pred_check
          %p307 = pneg %p121
        $region58: #{tpu_custom_call.1} parent=43 // pred_check_branch
          %309 = sbr.rel (%p307) target = $region60
        $region59: #{tpu_custom_call.1} parent=43 // pred_region
          %310 = dma.done [#allocation12], 512
        $region60: #{tpu_custom_call.1} parent=43 // pred_fallthru
          _
        // Predicated region
        $region61: #{tpu_custom_call.1} parent=43 // pred_check
          %p311 = pneg %p142
        $region62: #{tpu_custom_call.1} parent=43 // pred_check_branch
          %313 = sbr.rel (%p311) target = $region64
        $region63: #{tpu_custom_call.1} parent=43 // pred_region
          %314 = dma.done [#allocation12], 512
        $region64: #{tpu_custom_call.1} parent=43 // pred_fallthru
          _
        %s315 = sand.u32 %s45, 1
        %s316 = scalar_lea.sflag [#allocation6], %s315
        %s317 = sand.u32 %s45, 1
        %s318 = smul.addr %s317, 8
        %s319 = scalar_lea.vmem [#allocation5], %s318
        %p320 = pneg %p58
        %p321 = pneg %p55
        %p322 = pneg %p79
        %p323 = pneg %p76
        %p324 = pneg %p100
        %p325 = pneg %p97
        %p326 = pneg %p121
        %p327 = pneg %p118
        %p328 = pneg %p142
        %p329 = pneg %p139
        %p330 = pneg %p163
        %p331 = pneg %p160
        %p332 = pneg %p191
        %p333 = pneg %p188
        %s334 = sand.u32 %s178, 1
        %s335 = scalar_lea.sflag [#allocation7], %s334
        %s336 = sand.u32 %s178, 1
        %s337 = smul.addr %s336, 8
        %s338 = scalar_lea.vmem [#allocation14], %s337
        %p339 = scmp.eq.s32.totalorder %s30, 0
        // Predicated region
        $region65: #{tpu_custom_call.1} parent=43 // pred_check
          %p340 = pneg %p339
        $region66: #{tpu_custom_call.1} parent=43 // pred_check_branch
          %342 = sbr.rel (%p340) target = $region68
        $region67: #{tpu_custom_call.1} parent=43 // pred_region
          %v343 = vld [vmem:[%s294] sm:$0xff]
          %v344 = vld [vmem:[#allocation10] sm:$0xff]
          %v345 = vld [vmem:[#allocation10 + $0x8] sm:$0xff]
          %v346 = vld [vmem:[#allocation10 + $0x10] sm:$0xff]
          %v347 = vld [vmem:[#allocation10 + $0x18] sm:$0xff]
          %vm348 = vcmask 261120
          %v350 = vsel %vm348, %v343, 0
          %352 = vmatprep.subr.mxu0 0.0
          %353 = vmatpush1.msra.mxu0 0.0
          %354 = vmatprep.subr.mxu0 0.0
          %355 = vmatpush1.msra.mxu0 0.0
          %356 = vmatprep.subr.mxu0 0.0
          %357 = vmatpush1.msra.mxu0 0.0
          %358 = vmatprep.subr.mxu0 0.0
          %359 = vmatpush1.msra.mxu0 0.0
          %360 = vmatprep.subr.mxu0 0.0
          %361 = vmatpush1.msra.mxu0 0.0
          %362 = vmatprep.subr.mxu0 0.0
          %363 = vmatpush1.msra.mxu0 0.0
          %364 = vmatprep.subr.mxu0 0.0
          %365 = vmatpush1.msra.mxu0 0.0
          %366 = vmatprep.subr.mxu0 0.0
          %367 = vmatpush1.msra.mxu0 0.0
          %368 = vmatprep.subr.mxu0 0.0
          %369 = vmatpush1.msra.mxu0 0.0
          %370 = vmatprep.subr.mxu0 0.0
          %371 = vmatpush1.msra.mxu0 0.0
          %372 = vmatprep.subr.mxu0 0.0
          %373 = vmatpush1.msra.mxu0 0.0
          %374 = vmatprep.subr.mxu0 0.0
          %375 = vmatpush1.msra.mxu0 0.0
          %376 = vmatprep.subr.mxu0 0.0
          %377 = vmatpush1.msra.mxu0 %v347
          %378 = vmatprep.subr.mxu0 0.0
          %379 = vmatpush1.msra.mxu0 %v346
          %380 = vmatprep.subr.mxu0 0.0
          %381 = vmatpush1.msra.mxu0 %v345
          %382 = vmatprep.subr.mxu0 0.0
          %383 = vmatpush1.msra.mxu0 %v344
          %384 = vmatprep.subr.mxu0 0.0
          %385 = vmatpush2.msra.mxu0 0.0
          %386 = vmatprep.subr.mxu0 0.0
          %387 = vmatpush2.msra.mxu0 0.0
          %388 = vmatprep.subr.mxu0 0.0
          %389 = vmatpush2.msra.mxu0 0.0
          %390 = vmatprep.subr.mxu0 0.0
          %391 = vmatpush2.msra.mxu0 0.0
          %392 = vmatprep.subr.mxu0 0.0
          %393 = vmatpush2.msra.mxu0 0.0
          %394 = vmatprep.subr.mxu0 0.0
          %395 = vmatpush2.msra.mxu0 0.0
          %396 = vmatprep.subr.mxu0 0.0
          %397 = vmatpush2.msra.mxu0 0.0
          %398 = vmatprep.subr.mxu0 0.0
          %399 = vmatpush2.msra.mxu0 0.0
          %400 = vmatprep.subr.mxu0 0.0
          %401 = vmatpush2.msra.mxu0 0.0
          %402 = vmatprep.subr.mxu0 0.0
          %403 = vmatpush2.msra.mxu0 0.0
          %404 = vmatprep.subr.mxu0 0.0
          %405 = vmatpush2.msra.mxu0 0.0
          %406 = vmatprep.subr.mxu0 0.0
          %407 = vmatpush2.msra.mxu0 0.0
          %408 = vmatprep.subr.mxu0 0.0
          %409 = vmatpush2.msra.mxu0 0.0
          %410 = vmatprep.subr.mxu0 0.0
          %411 = vmatpush2.msra.mxu0 0.0
          %412 = vmatprep.subr.mxu0 0.0
          %413 = vmatpush2.msra.mxu0 0.0
          %414 = vmatprep.subr.mxu0 0.0
          %415 = vmatpush2.msra.mxu0 0.0
          %416 = vmatprep.mubr.f32.mxu0 0.0
          %417 = vmatmul.mubr.f32.gmra.mxu0 %v350
          %v418 = vpop.f32.mrf.mxu0
          %v419 = vadd.f32 0.0, %v418
          %v420 = vpop.f32.mrf.mxu0
          %421 = vdwg.mxu0
          %v422 = vld [vmem:[#allocation11] sm:$0xff]
          %v423 = vld [vmem:[#allocation11 + $0x8] sm:$0xff]
          %v424 = vld [vmem:[#allocation11 + $0x10] sm:$0xff]
          %v425 = vld [vmem:[#allocation11 + $0x18] sm:$0xff]
          %426 = vmatprep.subr.mxu0 0.0
          %427 = vmatpush1.msra.mxu0 0.0
          %428 = vmatprep.subr.mxu0 0.0
          %429 = vmatpush1.msra.mxu0 0.0
          %430 = vmatprep.subr.mxu0 0.0
          %431 = vmatpush1.msra.mxu0 0.0
          %432 = vmatprep.subr.mxu0 0.0
          %433 = vmatpush1.msra.mxu0 0.0
          %434 = vmatprep.subr.mxu0 0.0
          %435 = vmatpush1.msra.mxu0 0.0
          %436 = vmatprep.subr.mxu0 0.0
          %437 = vmatpush1.msra.mxu0 0.0
          %438 = vmatprep.subr.mxu0 0.0
          %439 = vmatpush1.msra.mxu0 0.0
          %440 = vmatprep.subr.mxu0 0.0
          %441 = vmatpush1.msra.mxu0 0.0
          %442 = vmatprep.subr.mxu0 0.0
          %443 = vmatpush1.msra.mxu0 0.0
          %444 = vmatprep.subr.mxu0 0.0
          %445 = vmatpush1.msra.mxu0 0.0
          %446 = vmatprep.subr.mxu0 0.0
          %447 = vmatpush1.msra.mxu0 0.0
          %448 = vmatprep.subr.mxu0 0.0
          %449 = vmatpush1.msra.mxu0 0.0
          %450 = vmatprep.subr.mxu0 0.0
          %451 = vmatpush1.msra.mxu0 %v425
          %452 = vmatprep.subr.mxu0 0.0
          %453 = vmatpush1.msra.mxu0 %v424
          %454 = vmatprep.subr.mxu0 0.0
          %455 = vmatpush1.msra.mxu0 %v423
          %456 = vmatprep.subr.mxu0 0.0
          %457 = vmatpush1.msra.mxu0 %v422
          %458 = vmatprep.subr.mxu0 0.0
          %459 = vmatpush2.msra.mxu0 0.0
          %460 = vmatprep.subr.mxu0 0.0
          %461 = vmatpush2.msra.mxu0 0.0
          %462 = vmatprep.subr.mxu0 0.0
          %463 = vmatpush2.msra.mxu0 0.0
          %464 = vmatprep.subr.mxu0 0.0
          %465 = vmatpush2.msra.mxu0 0.0
          %466 = vmatprep.subr.mxu0 0.0
          %467 = vmatpush2.msra.mxu0 0.0
          %468 = vmatprep.subr.mxu0 0.0
          %469 = vmatpush2.msra.mxu0 0.0
          %470 = vmatprep.subr.mxu0 0.0
          %471 = vmatpush2.msra.mxu0 0.0
          %472 = vmatprep.subr.mxu0 0.0
          %473 = vmatpush2.msra.mxu0 0.0
          %474 = vmatprep.subr.mxu0 0.0
          %475 = vmatpush2.msra.mxu0 0.0
          %476 = vmatprep.subr.mxu0 0.0
          %477 = vmatpush2.msra.mxu0 0.0
          %478 = vmatprep.subr.mxu0 0.0
          %479 = vmatpush2.msra.mxu0 0.0
          %480 = vmatprep.subr.mxu0 0.0
          %481 = vmatpush2.msra.mxu0 0.0
          %482 = vmatprep.subr.mxu0 0.0
          %483 = vmatpush2.msra.mxu0 0.0
          %484 = vmatprep.subr.mxu0 0.0
          %485 = vmatpush2.msra.mxu0 0.0
          %486 = vmatprep.subr.mxu0 0.0
          %487 = vmatpush2.msra.mxu0 0.0
          %488 = vmatprep.subr.mxu0 0.0
          %489 = vmatpush2.msra.mxu0 0.0
          %490 = vmatprep.mubr.f32.mxu0 0.0
          %491 = vmatmul.mubr.f32.gmra.mxu0 %v350
          %v492 = vpop.f32.mrf.mxu0
          %v493 = vadd.f32 0.0, %v492
          %v494 = vpop.f32.mrf.mxu0
          %495 = vdwg.mxu0
          %496 = vxpose.xlu0.b32.start [1/16] %v419, 128
          %497 = vxpose.xlu0.b32.cont [2/16] 0.0, 128
          %498 = vxpose.xlu0.b32.cont [3/16] 0.0, 128
          %499 = vxpose.xlu0.b32.cont [4/16] 0.0, 128
          %500 = vxpose.xlu0.b32.cont [5/16] 0.0, 128
          %501 = vxpose.xlu0.b32.cont [6/16] 0.0, 128
          %502 = vxpose.xlu0.b32.cont [7/16] 0.0, 128
          %503 = vxpose.xlu0.b32.cont [8/16] 0.0, 128
          %504 = vxpose.xlu0.b32.cont [9/16] 0.0, 128
          %505 = vxpose.xlu0.b32.cont [10/16] 0.0, 128
          %506 = vxpose.xlu0.b32.cont [11/16] 0.0, 128
          %507 = vxpose.xlu0.b32.cont [12/16] 0.0, 128
          %508 = vxpose.xlu0.b32.cont [13/16] 0.0, 128
          %509 = vxpose.xlu0.b32.cont [14/16] 0.0, 128
          %510 = vxpose.xlu0.b32.cont [15/16] 0.0, 128
          %511 = vxpose.xlu0.b32.end [16/16] 0.0, 128
          %v512 = vpop.trf.xlu0
          %v513 = vpop.trf.xlu0
          %v514 = vpop.trf.xlu0
          %v515 = vpop.trf.xlu0
          %v516 = vpop.trf.xlu0
          %v517 = vpop.trf.xlu0
          %v518 = vpop.trf.xlu0
          %v519 = vpop.trf.xlu0
          %v520 = vpop.trf.xlu0
          %v521 = vpop.trf.xlu0
          %v522 = vpop.trf.xlu0
          %v523 = vpop.trf.xlu0
          %v524 = vpop.trf.xlu0
          %v525 = vpop.trf.xlu0
          %v526 = vpop.trf.xlu0
          %v527 = vpop.trf.xlu0
          %vm528 = vcmask 64512
          %529 = vst.msk [vmem:[#allocation2] sm:$0xff] %vm528, %v512
          %530 = vst.msk [vmem:[#allocation3] sm:$0xff] %vm528, %v493
          %532 = vrot.lane.b32.xlu0 %v419, 120
          %v533 = vpop.permute.xlu0 %532
          %535 = vxpose.xlu0.b32.start [1/16] %v533, 128
          %536 = vxpose.xlu0.b32.cont [2/16] 0.0, 128
          %537 = vxpose.xlu0.b32.cont [3/16] 0.0, 128
          %538 = vxpose.xlu0.b32.cont [4/16] 0.0, 128
          %539 = vxpose.xlu0.b32.cont [5/16] 0.0, 128
          %540 = vxpose.xlu0.b32.cont [6/16] 0.0, 128
          %541 = vxpose.xlu0.b32.cont [7/16] 0.0, 128
          %542 = vxpose.xlu0.b32.cont [8/16] 0.0, 128
          %543 = vxpose.xlu0.b32.cont [9/16] 0.0, 128
          %544 = vxpose.xlu0.b32.cont [10/16] 0.0, 128
          %545 = vxpose.xlu0.b32.cont [11/16] 0.0, 128
          %546 = vxpose.xlu0.b32.cont [12/16] 0.0, 128
          %547 = vxpose.xlu0.b32.cont [13/16] 0.0, 128
          %548 = vxpose.xlu0.b32.cont [14/16] 0.0, 128
          %549 = vxpose.xlu0.b32.cont [15/16] 0.0, 128
          %550 = vxpose.xlu0.b32.end [16/16] 0.0, 128
          %v551 = vpop.trf.xlu0
          %v552 = vpop.trf.xlu0
          %v553 = vpop.trf.xlu0
          %v554 = vpop.trf.xlu0
          %v555 = vpop.trf.xlu0
          %v556 = vpop.trf.xlu0
          %v557 = vpop.trf.xlu0
          %v558 = vpop.trf.xlu0
          %v559 = vpop.trf.xlu0
          %v560 = vpop.trf.xlu0
          %v561 = vpop.trf.xlu0
          %v562 = vpop.trf.xlu0
          %v563 = vpop.trf.xlu0
          %v564 = vpop.trf.xlu0
          %v565 = vpop.trf.xlu0
          %v566 = vpop.trf.xlu0
          %s567 = scalar_lea.vmem [#allocation2], 8
          %568 = vst.msk [vmem:[%s567] sm:$0xff] %vm528, %v551
          %570 = vrot.lane.b32.xlu0 %v493, 120
          %v571 = vpop.permute.xlu0 %570
          %s573 = scalar_lea.vmem [#allocation3], 8
          %574 = vst.msk [vmem:[%s573] sm:$0xff] %vm528, %v571
          %575 = vrot.lane.b32.xlu0 %v419, 112
          %v576 = vpop.permute.xlu0 %575
          %578 = vxpose.xlu0.b32.start [1/16] %v576, 128
          %579 = vxpose.xlu0.b32.cont [2/16] 0.0, 128
          %580 = vxpose.xlu0.b32.cont [3/16] 0.0, 128
          %581 = vxpose.xlu0.b32.cont [4/16] 0.0, 128
          %582 = vxpose.xlu0.b32.cont [5/16] 0.0, 128
          %583 = vxpose.xlu0.b32.cont [6/16] 0.0, 128
          %584 = vxpose.xlu0.b32.cont [7/16] 0.0, 128
          %585 = vxpose.xlu0.b32.cont [8/16] 0.0, 128
          %586 = vxpose.xlu0.b32.cont [9/16] 0.0, 128
          %587 = vxpose.xlu0.b32.cont [10/16] 0.0, 128
          %588 = vxpose.xlu0.b32.cont [11/16] 0.0, 128
          %589 = vxpose.xlu0.b32.cont [12/16] 0.0, 128
          %590 = vxpose.xlu0.b32.cont [13/16] 0.0, 128
          %591 = vxpose.xlu0.b32.cont [14/16] 0.0, 128
          %592 = vxpose.xlu0.b32.cont [15/16] 0.0, 128
          %593 = vxpose.xlu0.b32.end [16/16] 0.0, 128
          %v594 = vpop.trf.xlu0
          %v595 = vpop.trf.xlu0
          %v596 = vpop.trf.xlu0
          %v597 = vpop.trf.xlu0
          %v598 = vpop.trf.xlu0
          %v599 = vpop.trf.xlu0
          %v600 = vpop.trf.xlu0
          %v601 = vpop.trf.xlu0
          %v602 = vpop.trf.xlu0
          %v603 = vpop.trf.xlu0
          %v604 = vpop.trf.xlu0
          %v605 = vpop.trf.xlu0
          %v606 = vpop.trf.xlu0
          %v607 = vpop.trf.xlu0
          %v608 = vpop.trf.xlu0
          %v609 = vpop.trf.xlu0
          %s610 = scalar_lea.vmem [#allocation2], 16
          %611 = vst.msk [vmem:[%s610] sm:$0xff] %vm528, %v594
          %612 = vrot.lane.b32.xlu0 %v493, 112
          %v613 = vpop.permute.xlu0 %612
          %s615 = scalar_lea.vmem [#allocation3], 16
          %616 = vst.msk [vmem:[%s615] sm:$0xff] %vm528, %v613
          %617 = vrot.lane.b32.xlu0 %v419, 104
          %v618 = vpop.permute.xlu0 %617
          %620 = vxpose.xlu0.b32.start [1/16] %v618, 128
          %621 = vxpose.xlu0.b32.cont [2/16] 0.0, 128
          %622 = vxpose.xlu0.b32.cont [3/16] 0.0, 128
          %623 = vxpose.xlu0.b32.cont [4/16] 0.0, 128
          %624 = vxpose.xlu0.b32.cont [5/16] 0.0, 128
          %625 = vxpose.xlu0.b32.cont [6/16] 0.0, 128
          %626 = vxpose.xlu0.b32.cont [7/16] 0.0, 128
          %627 = vxpose.xlu0.b32.cont [8/16] 0.0, 128
          %628 = vxpose.xlu0.b32.cont [9/16] 0.0, 128
          %629 = vxpose.xlu0.b32.cont [10/16] 0.0, 128
          %630 = vxpose.xlu0.b32.cont [11/16] 0.0, 128
          %631 = vxpose.xlu0.b32.cont [12/16] 0.0, 128
          %632 = vxpose.xlu0.b32.cont [13/16] 0.0, 128
          %633 = vxpose.xlu0.b32.cont [14/16] 0.0, 128
          %634 = vxpose.xlu0.b32.cont [15/16] 0.0, 128
          %635 = vxpose.xlu0.b32.end [16/16] 0.0, 128
          %v636 = vpop.trf.xlu0
          %v637 = vpop.trf.xlu0
          %v638 = vpop.trf.xlu0
          %v639 = vpop.trf.xlu0
          %v640 = vpop.trf.xlu0
          %v641 = vpop.trf.xlu0
          %v642 = vpop.trf.xlu0
          %v643 = vpop.trf.xlu0
          %v644 = vpop.trf.xlu0
          %v645 = vpop.trf.xlu0
          %v646 = vpop.trf.xlu0
          %v647 = vpop.trf.xlu0
          %v648 = vpop.trf.xlu0
          %v649 = vpop.trf.xlu0
          %v650 = vpop.trf.xlu0
          %v651 = vpop.trf.xlu0
          %s652 = scalar_lea.vmem [#allocation2], 24
          %653 = vst.msk [vmem:[%s652] sm:$0xff] %vm528, %v636
          %654 = vrot.lane.b32.xlu0 %v493, 104
          %v655 = vpop.permute.xlu0 %654
          %s657 = scalar_lea.vmem [#allocation3], 24
          %658 = vst.msk [vmem:[%s657] sm:$0xff] %vm528, %v655
        $region68: #{tpu_custom_call.1} parent=43 // pred_fallthru
          _
        %s659 = smul.u32 %s30, 8
        %s660 = scalar_lea.vmem %s294, %s659 [#allocation5]
        %v661 = vld [vmem:[%s660] sm:$0xff]
        %v662 = vld [vmem:[#allocation8] sm:$0xff]
        %v663 = vld [vmem:[#allocation8 + $0x8] sm:$0xff]
        %v664 = vld [vmem:[#allocation8 + $0x10] sm:$0xff]
        %v665 = vld [vmem:[#allocation8 + $0x18] sm:$0xff]
        %vm666 = vcmask 261120
        %v668 = vsel %vm666, %v661, 0
        %670 = vmatprep.subr.mxu0 0.0
        %671 = vmatpush1.msra.mxu0 0.0
        %672 = vmatprep.subr.mxu0 0.0
        %673 = vmatpush1.msra.mxu0 0.0
        %674 = vmatprep.subr.mxu0 0.0
        %675 = vmatpush1.msra.mxu0 0.0
        %676 = vmatprep.subr.mxu0 0.0
        %677 = vmatpush1.msra.mxu0 0.0
        %678 = vmatprep.subr.mxu0 0.0
        %679 = vmatpush1.msra.mxu0 0.0
        %680 = vmatprep.subr.mxu0 0.0
        %681 = vmatpush1.msra.mxu0 0.0
        %682 = vmatprep.subr.mxu0 0.0
        %683 = vmatpush1.msra.mxu0 0.0
        %684 = vmatprep.subr.mxu0 0.0
        %685 = vmatpush1.msra.mxu0 0.0
        %686 = vmatprep.subr.mxu0 0.0
        %687 = vmatpush1.msra.mxu0 0.0
        %688 = vmatprep.subr.mxu0 0.0
        %689 = vmatpush1.msra.mxu0 0.0
        %690 = vmatprep.subr.mxu0 0.0
        %691 = vmatpush1.msra.mxu0 0.0
        %692 = vmatprep.subr.mxu0 0.0
        %693 = vmatpush1.msra.mxu0 0.0
        %694 = vmatprep.subr.mxu0 0.0
        %695 = vmatpush1.msra.mxu0 %v665
        %696 = vmatprep.subr.mxu0 0.0
        %697 = vmatpush1.msra.mxu0 %v664
        %698 = vmatprep.subr.mxu0 0.0
        %699 = vmatpush1.msra.mxu0 %v663
        %700 = vmatprep.subr.mxu0 0.0
        %701 = vmatpush1.msra.mxu0 %v662
        %702 = vmatprep.subr.mxu0 0.0
        %703 = vmatpush2.msra.mxu0 0.0
        %704 = vmatprep.subr.mxu0 0.0
        %705 = vmatpush2.msra.mxu0 0.0
        %706 = vmatprep.subr.mxu0 0.0
        %707 = vmatpush2.msra.mxu0 0.0
        %708 = vmatprep.subr.mxu0 0.0
        %709 = vmatpush2.msra.mxu0 0.0
        %710 = vmatprep.subr.mxu0 0.0
        %711 = vmatpush2.msra.mxu0 0.0
        %712 = vmatprep.subr.mxu0 0.0
        %713 = vmatpush2.msra.mxu0 0.0
        %714 = vmatprep.subr.mxu0 0.0
        %715 = vmatpush2.msra.mxu0 0.0
        %716 = vmatprep.subr.mxu0 0.0
        %717 = vmatpush2.msra.mxu0 0.0
        %718 = vmatprep.subr.mxu0 0.0
        %719 = vmatpush2.msra.mxu0 0.0
        %720 = vmatprep.subr.mxu0 0.0
        %721 = vmatpush2.msra.mxu0 0.0
        %722 = vmatprep.subr.mxu0 0.0
        %723 = vmatpush2.msra.mxu0 0.0
        %724 = vmatprep.subr.mxu0 0.0
        %725 = vmatpush2.msra.mxu0 0.0
        %726 = vmatprep.subr.mxu0 0.0
        %727 = vmatpush2.msra.mxu0 0.0
        %728 = vmatprep.subr.mxu0 0.0
        %729 = vmatpush2.msra.mxu0 0.0
        %730 = vmatprep.subr.mxu0 0.0
        %731 = vmatpush2.msra.mxu0 0.0
        %732 = vmatprep.subr.mxu0 0.0
        %733 = vmatpush2.msra.mxu0 0.0
        %734 = vmatprep.mubr.f32.mxu0 0.0
        %735 = vmatmul.mubr.f32.gmra.mxu0 %v668
        %v736 = vpop.f32.mrf.mxu0
        %v737 = vadd.f32 0.0, %v736
        %v738 = vpop.f32.mrf.mxu0
        %739 = vdwg.mxu0
        %v740 = vld [vmem:[#allocation2] sm:$0xff]
        %vm741 = vcmask 64512
        %v743 = vsel %vm741, %v737, 0
        %745 = vmatprep.subr.mxu0 0.0
        %746 = vmatpush1.msra.mxu0 0.0
        %747 = vmatprep.subr.mxu0 0.0
        %748 = vmatpush1.msra.mxu0 0.0
        %749 = vmatprep.subr.mxu0 0.0
        %750 = vmatpush1.msra.mxu0 0.0
        %751 = vmatprep.subr.mxu0 0.0
        %752 = vmatpush1.msra.mxu0 0.0
        %753 = vmatprep.subr.mxu0 0.0
        %754 = vmatpush1.msra.mxu0 0.0
        %755 = vmatprep.subr.mxu0 0.0
        %756 = vmatpush1.msra.mxu0 0.0
        %757 = vmatprep.subr.mxu0 0.0
        %758 = vmatpush1.msra.mxu0 0.0
        %759 = vmatprep.subr.mxu0 0.0
        %760 = vmatpush1.msra.mxu0 0.0
        %761 = vmatprep.subr.mxu0 0.0
        %762 = vmatpush1.msra.mxu0 0.0
        %763 = vmatprep.subr.mxu0 0.0
        %764 = vmatpush1.msra.mxu0 0.0
        %765 = vmatprep.subr.mxu0 0.0
        %766 = vmatpush1.msra.mxu0 0.0
        %767 = vmatprep.subr.mxu0 0.0
        %768 = vmatpush1.msra.mxu0 0.0
        %769 = vmatprep.subr.mxu0 0.0
        %770 = vmatpush1.msra.mxu0 0.0
        %771 = vmatprep.subr.mxu0 0.0
        %772 = vmatpush1.msra.mxu0 0.0
        %773 = vmatprep.subr.mxu0 0.0
        %774 = vmatpush1.msra.mxu0 0.0
        %775 = vmatprep.subr.mxu0 0.0
        %776 = vmatpush1.msra.mxu0 %v740
        %777 = vmatprep.subr.mxu0 0.0
        %778 = vmatpush2.msra.mxu0 0.0
        %779 = vmatprep.subr.mxu0 0.0
        %780 = vmatpush2.msra.mxu0 0.0
        %781 = vmatprep.subr.mxu0 0.0
        %782 = vmatpush2.msra.mxu0 0.0
        %783 = vmatprep.subr.mxu0 0.0
        %784 = vmatpush2.msra.mxu0 0.0
        %785 = vmatprep.subr.mxu0 0.0
        %786 = vmatpush2.msra.mxu0 0.0
        %787 = vmatprep.subr.mxu0 0.0
        %788 = vmatpush2.msra.mxu0 0.0
        %789 = vmatprep.subr.mxu0 0.0
        %790 = vmatpush2.msra.mxu0 0.0
        %791 = vmatprep.subr.mxu0 0.0
        %792 = vmatpush2.msra.mxu0 0.0
        %793 = vmatprep.subr.mxu0 0.0
        %794 = vmatpush2.msra.mxu0 0.0
        %795 = vmatprep.subr.mxu0 0.0
        %796 = vmatpush2.msra.mxu0 0.0
        %797 = vmatprep.subr.mxu0 0.0
        %798 = vmatpush2.msra.mxu0 0.0
        %799 = vmatprep.subr.mxu0 0.0
        %800 = vmatpush2.msra.mxu0 0.0
        %801 = vmatprep.subr.mxu0 0.0
        %802 = vmatpush2.msra.mxu0 0.0
        %803 = vmatprep.subr.mxu0 0.0
        %804 = vmatpush2.msra.mxu0 0.0
        %805 = vmatprep.subr.mxu0 0.0
        %806 = vmatpush2.msra.mxu0 0.0
        %807 = vmatprep.subr.mxu0 0.0
        %808 = vmatpush2.msra.mxu0 0.0
        %809 = vmatprep.mubr.f32.mxu0 0.0
        %810 = vmatmul.mubr.f32.gmra.mxu0 %v743
        %v811 = vpop.f32.mrf.mxu0
        %v812 = vadd.f32 0.0, %v811
        %v813 = vpop.f32.mrf.mxu0
        %814 = vdwg.mxu0
        %v815 = vsel %vm741, %v812, -inf
        %816 = vmax.xlane.f32.xlu0 %v815
        %v817 = vpop.xlane.xlu0 %816
        %v818 = vsub.f32 %v812, %v817
        %v819 = vmul.f32 %v818, 1.442695
        %v820 = vpow.pop %v819
        %v821 = vsel %vm741, %v820, 0.0
        %822 = vadd.xlane.f32.xlu0 %v821
        %v823 = vpop.xlane.xlu0 %822
        %v824 = vld [vmem:[#allocation3] sm:$0xff]
        %v826 = vsel %vm741, %v820, 0
        %828 = vmatprep.subr.mxu0 0.0
        %829 = vmatpush1.msra.mxu0 0.0
        %830 = vmatprep.subr.mxu0 0.0
        %831 = vmatpush1.msra.mxu0 0.0
        %832 = vmatprep.subr.mxu0 0.0
        %833 = vmatpush1.msra.mxu0 0.0
        %834 = vmatprep.subr.mxu0 0.0
        %835 = vmatpush1.msra.mxu0 0.0
        %836 = vmatprep.subr.mxu0 0.0
        %837 = vmatpush1.msra.mxu0 0.0
        %838 = vmatprep.subr.mxu0 0.0
        %839 = vmatpush1.msra.mxu0 0.0
        %840 = vmatprep.subr.mxu0 0.0
        %841 = vmatpush1.msra.mxu0 0.0
        %842 = vmatprep.subr.mxu0 0.0
        %843 = vmatpush1.msra.mxu0 0.0
        %844 = vmatprep.subr.mxu0 0.0
        %845 = vmatpush1.msra.mxu0 0.0
        %846 = vmatprep.subr.mxu0 0.0
        %847 = vmatpush1.msra.mxu0 0.0
        %848 = vmatprep.subr.mxu0 0.0
        %849 = vmatpush1.msra.mxu0 0.0
        %850 = vmatprep.subr.mxu0 0.0
        %851 = vmatpush1.msra.mxu0 0.0
        %852 = vmatprep.subr.mxu0 0.0
        %853 = vmatpush1.msra.mxu0 0.0
        %854 = vmatprep.subr.mxu0 0.0
        %855 = vmatpush1.msra.mxu0 0.0
        %856 = vmatprep.subr.mxu0 0.0
        %857 = vmatpush1.msra.mxu0 0.0
        %858 = vmatprep.subr.mxu0 0.0
        %859 = vmatpush1.msra.mxu0 %v824
        %860 = vmatprep.subr.mxu0 0.0
        %861 = vmatpush2.msra.mxu0 0.0
        %862 = vmatprep.subr.mxu0 0.0
        %863 = vmatpush2.msra.mxu0 0.0
        %864 = vmatprep.subr.mxu0 0.0
        %865 = vmatpush2.msra.mxu0 0.0
        %866 = vmatprep.subr.mxu0 0.0
        %867 = vmatpush2.msra.mxu0 0.0
        %868 = vmatprep.subr.mxu0 0.0
        %869 = vmatpush2.msra.mxu0 0.0
        %870 = vmatprep.subr.mxu0 0.0
        %871 = vmatpush2.msra.mxu0 0.0
        %872 = vmatprep.subr.mxu0 0.0
        %873 = vmatpush2.msra.mxu0 0.0
        %874 = vmatprep.subr.mxu0 0.0
        %875 = vmatpush2.msra.mxu0 0.0
        %876 = vmatprep.subr.mxu0 0.0
        %877 = vmatpush2.msra.mxu0 0.0
        %878 = vmatprep.subr.mxu0 0.0
        %879 = vmatpush2.msra.mxu0 0.0
        %880 = vmatprep.subr.mxu0 0.0
        %881 = vmatpush2.msra.mxu0 0.0
        %882 = vmatprep.subr.mxu0 0.0
        %883 = vmatpush2.msra.mxu0 0.0
        %884 = vmatprep.subr.mxu0 0.0
        %885 = vmatpush2.msra.mxu0 0.0
        %886 = vmatprep.subr.mxu0 0.0
        %887 = vmatpush2.msra.mxu0 0.0
        %888 = vmatprep.subr.mxu0 0.0
        %889 = vmatpush2.msra.mxu0 0.0
        %890 = vmatprep.subr.mxu0 0.0
        %891 = vmatpush2.msra.mxu0 0.0
        %892 = vmatprep.mubr.f32.mxu0 0.0
        %893 = vmatmul.mubr.f32.gmra.mxu0 %v826
        %v894 = vpop.f32.mrf.mxu0
        %v895 = vadd.f32 0.0, %v894
        %v896 = vpop.f32.mrf.mxu0
        %897 = vdwg.mxu0
        %v898 = vrcp.pop %v823
        %v899 = vmul.f32 %v895, %v898
        %900 = vst.msk [vmem:[#allocation4] sm:$0xff] %vm741, %v899
        %s901 = scalar_lea.vmem [#allocation2], 8
        %v902 = vld [vmem:[%s901] sm:$0xff]
        %903 = vrot.lane.b32.xlu0 %v737, 120
        %v904 = vpop.permute.xlu0 %903
        %v905 = vsel %vm741, %v904, 0
        %907 = vmatprep.subr.mxu0 0.0
        %908 = vmatpush1.msra.mxu0 0.0
        %909 = vmatprep.subr.mxu0 0.0
        %910 = vmatpush1.msra.mxu0 0.0
        %911 = vmatprep.subr.mxu0 0.0
        %912 = vmatpush1.msra.mxu0 0.0
        %913 = vmatprep.subr.mxu0 0.0
        %914 = vmatpush1.msra.mxu0 0.0
        %915 = vmatprep.subr.mxu0 0.0
        %916 = vmatpush1.msra.mxu0 0.0
        %917 = vmatprep.subr.mxu0 0.0
        %918 = vmatpush1.msra.mxu0 0.0
        %919 = vmatprep.subr.mxu0 0.0
        %920 = vmatpush1.msra.mxu0 0.0
        %921 = vmatprep.subr.mxu0 0.0
        %922 = vmatpush1.msra.mxu0 0.0
        %923 = vmatprep.subr.mxu0 0.0
        %924 = vmatpush1.msra.mxu0 0.0
        %925 = vmatprep.subr.mxu0 0.0
        %926 = vmatpush1.msra.mxu0 0.0
        %927 = vmatprep.subr.mxu0 0.0
        %928 = vmatpush1.msra.mxu0 0.0
        %929 = vmatprep.subr.mxu0 0.0
        %930 = vmatpush1.msra.mxu0 0.0
        %931 = vmatprep.subr.mxu0 0.0
        %932 = vmatpush1.msra.mxu0 0.0
        %933 = vmatprep.subr.mxu0 0.0
        %934 = vmatpush1.msra.mxu0 0.0
        %935 = vmatprep.subr.mxu0 0.0
        %936 = vmatpush1.msra.mxu0 0.0
        %937 = vmatprep.subr.mxu0 0.0
        %938 = vmatpush1.msra.mxu0 %v902
        %939 = vmatprep.subr.mxu0 0.0
        %940 = vmatpush2.msra.mxu0 0.0
        %941 = vmatprep.subr.mxu0 0.0
        %942 = vmatpush2.msra.mxu0 0.0
        %943 = vmatprep.subr.mxu0 0.0
        %944 = vmatpush2.msra.mxu0 0.0
        %945 = vmatprep.subr.mxu0 0.0
        %946 = vmatpush2.msra.mxu0 0.0
        %947 = vmatprep.subr.mxu0 0.0
        %948 = vmatpush2.msra.mxu0 0.0
        %949 = vmatprep.subr.mxu0 0.0
        %950 = vmatpush2.msra.mxu0 0.0
        %951 = vmatprep.subr.mxu0 0.0
        %952 = vmatpush2.msra.mxu0 0.0
        %953 = vmatprep.subr.mxu0 0.0
        %954 = vmatpush2.msra.mxu0 0.0
        %955 = vmatprep.subr.mxu0 0.0
        %956 = vmatpush2.msra.mxu0 0.0
        %957 = vmatprep.subr.mxu0 0.0
        %958 = vmatpush2.msra.mxu0 0.0
        %959 = vmatprep.subr.mxu0 0.0
        %960 = vmatpush2.msra.mxu0 0.0
        %961 = vmatprep.subr.mxu0 0.0
        %962 = vmatpush2.msra.mxu0 0.0
        %963 = vmatprep.subr.mxu0 0.0
        %964 = vmatpush2.msra.mxu0 0.0
        %965 = vmatprep.subr.mxu0 0.0
        %966 = vmatpush2.msra.mxu0 0.0
        %967 = vmatprep.subr.mxu0 0.0
        %968 = vmatpush2.msra.mxu0 0.0
        %969 = vmatprep.subr.mxu0 0.0
        %970 = vmatpush2.msra.mxu0 0.0
        %971 = vmatprep.mubr.f32.mxu0 0.0
        %972 = vmatmul.mubr.f32.gmra.mxu0 %v905
        %v973 = vpop.f32.mrf.mxu0
        %v974 = vadd.f32 0.0, %v973
        %v975 = vpop.f32.mrf.mxu0
        %976 = vdwg.mxu0
        %v977 = vsel %vm741, %v974, -inf
        %978 = vmax.xlane.f32.xlu0 %v977
        %v979 = vpop.xlane.xlu0 %978
        %v980 = vsub.f32 %v974, %v979
        %v981 = vmul.f32 %v980, 1.442695
        %v982 = vpow.pop %v981
        %v983 = vsel %vm741, %v982, 0.0
        %984 = vadd.xlane.f32.xlu0 %v983
        %v985 = vpop.xlane.xlu0 %984
        %s986 = scalar_lea.vmem [#allocation3], 8
        %v987 = vld [vmem:[%s986] sm:$0xff]
        %v989 = vsel %vm741, %v982, 0
        %991 = vmatprep.subr.mxu0 0.0
        %992 = vmatpush1.msra.mxu0 0.0
        %993 = vmatprep.subr.mxu0 0.0
        %994 = vmatpush1.msra.mxu0 0.0
        %995 = vmatprep.subr.mxu0 0.0
        %996 = vmatpush1.msra.mxu0 0.0
        %997 = vmatprep.subr.mxu0 0.0
        %998 = vmatpush1.msra.mxu0 0.0
        %999 = vmatprep.subr.mxu0 0.0
        %1000 = vmatpush1.msra.mxu0 0.0
        %1001 = vmatprep.subr.mxu0 0.0
        %1002 = vmatpush1.msra.mxu0 0.0
        %1003 = vmatprep.subr.mxu0 0.0
        %1004 = vmatpush1.msra.mxu0 0.0
        %1005 = vmatprep.subr.mxu0 0.0
        %1006 = vmatpush1.msra.mxu0 0.0
        %1007 = vmatprep.subr.mxu0 0.0
        %1008 = vmatpush1.msra.mxu0 0.0
        %1009 = vmatprep.subr.mxu0 0.0
        %1010 = vmatpush1.msra.mxu0 0.0
        %1011 = vmatprep.subr.mxu0 0.0
        %1012 = vmatpush1.msra.mxu0 0.0
        %1013 = vmatprep.subr.mxu0 0.0
        %1014 = vmatpush1.msra.mxu0 0.0
        %1015 = vmatprep.subr.mxu0 0.0
        %1016 = vmatpush1.msra.mxu0 0.0
        %1017 = vmatprep.subr.mxu0 0.0
        %1018 = vmatpush1.msra.mxu0 0.0
        %1019 = vmatprep.subr.mxu0 0.0
        %1020 = vmatpush1.msra.mxu0 0.0
        %1021 = vmatprep.subr.mxu0 0.0
        %1022 = vmatpush1.msra.mxu0 %v987
        %1023 = vmatprep.subr.mxu0 0.0
        %1024 = vmatpush2.msra.mxu0 0.0
        %1025 = vmatprep.subr.mxu0 0.0
        %1026 = vmatpush2.msra.mxu0 0.0
        %1027 = vmatprep.subr.mxu0 0.0
        %1028 = vmatpush2.msra.mxu0 0.0
        %1029 = vmatprep.subr.mxu0 0.0
        %1030 = vmatpush2.msra.mxu0 0.0
        %1031 = vmatprep.subr.mxu0 0.0
        %1032 = vmatpush2.msra.mxu0 0.0
        %1033 = vmatprep.subr.mxu0 0.0
        %1034 = vmatpush2.msra.mxu0 0.0
        %1035 = vmatprep.subr.mxu0 0.0
        %1036 = vmatpush2.msra.mxu0 0.0
        %1037 = vmatprep.subr.mxu0 0.0
        %1038 = vmatpush2.msra.mxu0 0.0
        %1039 = vmatprep.subr.mxu0 0.0
        %1040 = vmatpush2.msra.mxu0 0.0
        %1041 = vmatprep.subr.mxu0 0.0
        %1042 = vmatpush2.msra.mxu0 0.0
        %1043 = vmatprep.subr.mxu0 0.0
        %1044 = vmatpush2.msra.mxu0 0.0
        %1045 = vmatprep.subr.mxu0 0.0
        %1046 = vmatpush2.msra.mxu0 0.0
        %1047 = vmatprep.subr.mxu0 0.0
        %1048 = vmatpush2.msra.mxu0 0.0
        %1049 = vmatprep.subr.mxu0 0.0
        %1050 = vmatpush2.msra.mxu0 0.0
        %1051 = vmatprep.subr.mxu0 0.0
        %1052 = vmatpush2.msra.mxu0 0.0
        %1053 = vmatprep.subr.mxu0 0.0
        %1054 = vmatpush2.msra.mxu0 0.0
        %1055 = vmatprep.mubr.f32.mxu0 0.0
        %1056 = vmatmul.mubr.f32.gmra.mxu0 %v989
        %v1057 = vpop.f32.mrf.mxu0
        %v1058 = vadd.f32 0.0, %v1057
        %v1059 = vpop.f32.mrf.mxu0
        %1060 = vdwg.mxu0
        %v1061 = vrcp.pop %v985
        %v1062 = vmul.f32 %v1058, %v1061
        %1064 = vrot.lane.b32.xlu0 %v1062, 8
        %v1065 = vpop.permute.xlu0 %1064
        %vm1067 = vcmask 130112
        %1068 = vst.msk [vmem:[#allocation4] sm:$0xff] %vm1067, %v1065
        %s1069 = scalar_lea.vmem [#allocation2], 16
        %v1070 = vld [vmem:[%s1069] sm:$0xff]
        %1071 = vrot.lane.b32.xlu0 %v737, 112
        %v1072 = vpop.permute.xlu0 %1071
        %v1073 = vsel %vm741, %v1072, 0
        %1075 = vmatprep.subr.mxu0 0.0
        %1076 = vmatpush1.msra.mxu0 0.0
        %1077 = vmatprep.subr.mxu0 0.0
        %1078 = vmatpush1.msra.mxu0 0.0
        %1079 = vmatprep.subr.mxu0 0.0
        %1080 = vmatpush1.msra.mxu0 0.0
        %1081 = vmatprep.subr.mxu0 0.0
        %1082 = vmatpush1.msra.mxu0 0.0
        %1083 = vmatprep.subr.mxu0 0.0
        %1084 = vmatpush1.msra.mxu0 0.0
        %1085 = vmatprep.subr.mxu0 0.0
        %1086 = vmatpush1.msra.mxu0 0.0
        %1087 = vmatprep.subr.mxu0 0.0
        %1088 = vmatpush1.msra.mxu0 0.0
        %1089 = vmatprep.subr.mxu0 0.0
        %1090 = vmatpush1.msra.mxu0 0.0
        %1091 = vmatprep.subr.mxu0 0.0
        %1092 = vmatpush1.msra.mxu0 0.0
        %1093 = vmatprep.subr.mxu0 0.0
        %1094 = vmatpush1.msra.mxu0 0.0
        %1095 = vmatprep.subr.mxu0 0.0
        %1096 = vmatpush1.msra.mxu0 0.0
        %1097 = vmatprep.subr.mxu0 0.0
        %1098 = vmatpush1.msra.mxu0 0.0
        %1099 = vmatprep.subr.mxu0 0.0
        %1100 = vmatpush1.msra.mxu0 0.0
        %1101 = vmatprep.subr.mxu0 0.0
        %1102 = vmatpush1.msra.mxu0 0.0
        %1103 = vmatprep.subr.mxu0 0.0
        %1104 = vmatpush1.msra.mxu0 0.0
        %1105 = vmatprep.subr.mxu0 0.0
        %1106 = vmatpush1.msra.mxu0 %v1070
        %1107 = vmatprep.subr.mxu0 0.0
        %1108 = vmatpush2.msra.mxu0 0.0
        %1109 = vmatprep.subr.mxu0 0.0
        %1110 = vmatpush2.msra.mxu0 0.0
        %1111 = vmatprep.subr.mxu0 0.0
        %1112 = vmatpush2.msra.mxu0 0.0
        %1113 = vmatprep.subr.mxu0 0.0
        %1114 = vmatpush2.msra.mxu0 0.0
        %1115 = vmatprep.subr.mxu0 0.0
        %1116 = vmatpush2.msra.mxu0 0.0
        %1117 = vmatprep.subr.mxu0 0.0
        %1118 = vmatpush2.msra.mxu0 0.0
        %1119 = vmatprep.subr.mxu0 0.0
        %1120 = vmatpush2.msra.mxu0 0.0
        %1121 = vmatprep.subr.mxu0 0.0
        %1122 = vmatpush2.msra.mxu0 0.0
        %1123 = vmatprep.subr.mxu0 0.0
        %1124 = vmatpush2.msra.mxu0 0.0
        %1125 = vmatprep.subr.mxu0 0.0
        %1126 = vmatpush2.msra.mxu0 0.0
        %1127 = vmatprep.subr.mxu0 0.0
        %1128 = vmatpush2.msra.mxu0 0.0
        %1129 = vmatprep.subr.mxu0 0.0
        %1130 = vmatpush2.msra.mxu0 0.0
        %1131 = vmatprep.subr.mxu0 0.0
        %1132 = vmatpush2.msra.mxu0 0.0
        %1133 = vmatprep.subr.mxu0 0.0
        %1134 = vmatpush2.msra.mxu0 0.0
        %1135 = vmatprep.subr.mxu0 0.0
        %1136 = vmatpush2.msra.mxu0 0.0
        %1137 = vmatprep.subr.mxu0 0.0
        %1138 = vmatpush2.msra.mxu0 0.0
        %1139 = vmatprep.mubr.f32.mxu0 0.0
        %1140 = vmatmul.mubr.f32.gmra.mxu0 %v1073
        %v1141 = vpop.f32.mrf.mxu0
        %v1142 = vadd.f32 0.0, %v1141
        %v1143 = vpop.f32.mrf.mxu0
        %1144 = vdwg.mxu0
        %v1145 = vsel %vm741, %v1142, -inf
        %1146 = vmax.xlane.f32.xlu0 %v1145
        %v1147 = vpop.xlane.xlu0 %1146
        %v1148 = vsub.f32 %v1142, %v1147
        %v1149 = vmul.f32 %v1148, 1.442695
        %v1150 = vpow.pop %v1149
        %v1151 = vsel %vm741, %v1150, 0.0
        %1152 = vadd.xlane.f32.xlu0 %v1151
        %v1153 = vpop.xlane.xlu0 %1152
        %s1154 = scalar_lea.vmem [#allocation3], 16
        %v1155 = vld [vmem:[%s1154] sm:$0xff]
        %v1157 = vsel %vm741, %v1150, 0
        %1159 = vmatprep.subr.mxu0 0.0
        %1160 = vmatpush1.msra.mxu0 0.0
        %1161 = vmatprep.subr.mxu0 0.0
        %1162 = vmatpush1.msra.mxu0 0.0
        %1163 = vmatprep.subr.mxu0 0.0
        %1164 = vmatpush1.msra.mxu0 0.0
        %1165 = vmatprep.subr.mxu0 0.0
        %1166 = vmatpush1.msra.mxu0 0.0
        %1167 = vmatprep.subr.mxu0 0.0
        %1168 = vmatpush1.msra.mxu0 0.0
        %1169 = vmatprep.subr.mxu0 0.0
        %1170 = vmatpush1.msra.mxu0 0.0
        %1171 = vmatprep.subr.mxu0 0.0
        %1172 = vmatpush1.msra.mxu0 0.0
        %1173 = vmatprep.subr.mxu0 0.0
        %1174 = vmatpush1.msra.mxu0 0.0
        %1175 = vmatprep.subr.mxu0 0.0
        %1176 = vmatpush1.msra.mxu0 0.0
        %1177 = vmatprep.subr.mxu0 0.0
        %1178 = vmatpush1.msra.mxu0 0.0
        %1179 = vmatprep.subr.mxu0 0.0
        %1180 = vmatpush1.msra.mxu0 0.0
        %1181 = vmatprep.subr.mxu0 0.0
        %1182 = vmatpush1.msra.mxu0 0.0
        %1183 = vmatprep.subr.mxu0 0.0
        %1184 = vmatpush1.msra.mxu0 0.0
        %1185 = vmatprep.subr.mxu0 0.0
        %1186 = vmatpush1.msra.mxu0 0.0
        %1187 = vmatprep.subr.mxu0 0.0
        %1188 = vmatpush1.msra.mxu0 0.0
        %1189 = vmatprep.subr.mxu0 0.0
        %1190 = vmatpush1.msra.mxu0 %v1155
        %1191 = vmatprep.subr.mxu0 0.0
        %1192 = vmatpush2.msra.mxu0 0.0
        %1193 = vmatprep.subr.mxu0 0.0
        %1194 = vmatpush2.msra.mxu0 0.0
        %1195 = vmatprep.subr.mxu0 0.0
        %1196 = vmatpush2.msra.mxu0 0.0
        %1197 = vmatprep.subr.mxu0 0.0
        %1198 = vmatpush2.msra.mxu0 0.0
        %1199 = vmatprep.subr.mxu0 0.0
        %1200 = vmatpush2.msra.mxu0 0.0
        %1201 = vmatprep.subr.mxu0 0.0
        %1202 = vmatpush2.msra.mxu0 0.0
        %1203 = vmatprep.subr.mxu0 0.0
        %1204 = vmatpush2.msra.mxu0 0.0
        %1205 = vmatprep.subr.mxu0 0.0
        %1206 = vmatpush2.msra.mxu0 0.0
        %1207 = vmatprep.subr.mxu0 0.0
        %1208 = vmatpush2.msra.mxu0 0.0
        %1209 = vmatprep.subr.mxu0 0.0
        %1210 = vmatpush2.msra.mxu0 0.0
        %1211 = vmatprep.subr.mxu0 0.0
        %1212 = vmatpush2.msra.mxu0 0.0
        %1213 = vmatprep.subr.mxu0 0.0
        %1214 = vmatpush2.msra.mxu0 0.0
        %1215 = vmatprep.subr.mxu0 0.0
        %1216 = vmatpush2.msra.mxu0 0.0
        %1217 = vmatprep.subr.mxu0 0.0
        %1218 = vmatpush2.msra.mxu0 0.0
        %1219 = vmatprep.subr.mxu0 0.0
        %1220 = vmatpush2.msra.mxu0 0.0
        %1221 = vmatprep.subr.mxu0 0.0
        %1222 = vmatpush2.msra.mxu0 0.0
        %1223 = vmatprep.mubr.f32.mxu0 0.0
        %1224 = vmatmul.mubr.f32.gmra.mxu0 %v1157
        %v1225 = vpop.f32.mrf.mxu0
        %v1226 = vadd.f32 0.0, %v1225
        %v1227 = vpop.f32.mrf.mxu0
        %1228 = vdwg.mxu0
        %v1229 = vrcp.pop %v1153
        %v1230 = vmul.f32 %v1226, %v1229
        %1232 = vrot.lane.b32.xlu0 %v1230, 16
        %v1233 = vpop.permute.xlu0 %1232
        %vm1235 = vcmask 195712
        %1236 = vst.msk [vmem:[#allocation4] sm:$0xff] %vm1235, %v1233
        %s1237 = scalar_lea.vmem [#allocation2], 24
        %v1238 = vld [vmem:[%s1237] sm:$0xff]
        %1239 = vrot.lane.b32.xlu0 %v737, 104
        %v1240 = vpop.permute.xlu0 %1239
        %v1241 = vsel %vm741, %v1240, 0
        %1243 = vmatprep.subr.mxu0 0.0
        %1244 = vmatpush1.msra.mxu0 0.0
        %1245 = vmatprep.subr.mxu0 0.0
        %1246 = vmatpush1.msra.mxu0 0.0
        %1247 = vmatprep.subr.mxu0 0.0
        %1248 = vmatpush1.msra.mxu0 0.0
        %1249 = vmatprep.subr.mxu0 0.0
        %1250 = vmatpush1.msra.mxu0 0.0
        %1251 = vmatprep.subr.mxu0 0.0
        %1252 = vmatpush1.msra.mxu0 0.0
        %1253 = vmatprep.subr.mxu0 0.0
        %1254 = vmatpush1.msra.mxu0 0.0
        %1255 = vmatprep.subr.mxu0 0.0
        %1256 = vmatpush1.msra.mxu0 0.0
        %1257 = vmatprep.subr.mxu0 0.0
        %1258 = vmatpush1.msra.mxu0 0.0
        %1259 = vmatprep.subr.mxu0 0.0
        %1260 = vmatpush1.msra.mxu0 0.0
        %1261 = vmatprep.subr.mxu0 0.0
        %1262 = vmatpush1.msra.mxu0 0.0
        %1263 = vmatprep.subr.mxu0 0.0
        %1264 = vmatpush1.msra.mxu0 0.0
        %1265 = vmatprep.subr.mxu0 0.0
        %1266 = vmatpush1.msra.mxu0 0.0
        %1267 = vmatprep.subr.mxu0 0.0
        %1268 = vmatpush1.msra.mxu0 0.0
        %1269 = vmatprep.subr.mxu0 0.0
        %1270 = vmatpush1.msra.mxu0 0.0
        %1271 = vmatprep.subr.mxu0 0.0
        %1272 = vmatpush1.msra.mxu0 0.0
        %1273 = vmatprep.subr.mxu0 0.0
        %1274 = vmatpush1.msra.mxu0 %v1238
        %1275 = vmatprep.subr.mxu0 0.0
        %1276 = vmatpush2.msra.mxu0 0.0
        %1277 = vmatprep.subr.mxu0 0.0
        %1278 = vmatpush2.msra.mxu0 0.0
        %1279 = vmatprep.subr.mxu0 0.0
        %1280 = vmatpush2.msra.mxu0 0.0
        %1281 = vmatprep.subr.mxu0 0.0
        %1282 = vmatpush2.msra.mxu0 0.0
        %1283 = vmatprep.subr.mxu0 0.0
        %1284 = vmatpush2.msra.mxu0 0.0
        %1285 = vmatprep.subr.mxu0 0.0
        %1286 = vmatpush2.msra.mxu0 0.0
        %1287 = vmatprep.subr.mxu0 0.0
        %1288 = vmatpush2.msra.mxu0 0.0
        %1289 = vmatprep.subr.mxu0 0.0
        %1290 = vmatpush2.msra.mxu0 0.0
        %1291 = vmatprep.subr.mxu0 0.0
        %1292 = vmatpush2.msra.mxu0 0.0
        %1293 = vmatprep.subr.mxu0 0.0
        %1294 = vmatpush2.msra.mxu0 0.0
        %1295 = vmatprep.subr.mxu0 0.0
        %1296 = vmatpush2.msra.mxu0 0.0
        %1297 = vmatprep.subr.mxu0 0.0
        %1298 = vmatpush2.msra.mxu0 0.0
        %1299 = vmatprep.subr.mxu0 0.0
        %1300 = vmatpush2.msra.mxu0 0.0
        %1301 = vmatprep.subr.mxu0 0.0
        %1302 = vmatpush2.msra.mxu0 0.0
        %1303 = vmatprep.subr.mxu0 0.0
        %1304 = vmatpush2.msra.mxu0 0.0
        %1305 = vmatprep.subr.mxu0 0.0
        %1306 = vmatpush2.msra.mxu0 0.0
        %1307 = vmatprep.mubr.f32.mxu0 0.0
        %1308 = vmatmul.mubr.f32.gmra.mxu0 %v1241
        %v1309 = vpop.f32.mrf.mxu0
        %v1310 = vadd.f32 0.0, %v1309
        %v1311 = vpop.f32.mrf.mxu0
        %1312 = vdwg.mxu0
        %v1313 = vsel %vm741, %v1310, -inf
        %1314 = vmax.xlane.f32.xlu0 %v1313
        %v1315 = vpop.xlane.xlu0 %1314
        %v1316 = vsub.f32 %v1310, %v1315
        %v1317 = vmul.f32 %v1316, 1.442695
        %v1318 = vpow.pop %v1317
        %v1319 = vsel %vm741, %v1318, 0.0
        %1320 = vadd.xlane.f32.xlu0 %v1319
        %v1321 = vpop.xlane.xlu0 %1320
        %s1322 = scalar_lea.vmem [#allocation3], 24
        %v1323 = vld [vmem:[%s1322] sm:$0xff]
        %v1325 = vsel %vm741, %v1318, 0
        %1327 = vmatprep.subr.mxu0 0.0
        %1328 = vmatpush1.msra.mxu0 0.0
        %1329 = vmatprep.subr.mxu0 0.0
        %1330 = vmatpush1.msra.mxu0 0.0
        %1331 = vmatprep.subr.mxu0 0.0
        %1332 = vmatpush1.msra.mxu0 0.0
        %1333 = vmatprep.subr.mxu0 0.0
        %1334 = vmatpush1.msra.mxu0 0.0
        %1335 = vmatprep.subr.mxu0 0.0
        %1336 = vmatpush1.msra.mxu0 0.0
        %1337 = vmatprep.subr.mxu0 0.0
        %1338 = vmatpush1.msra.mxu0 0.0
        %1339 = vmatprep.subr.mxu0 0.0
        %1340 = vmatpush1.msra.mxu0 0.0
        %1341 = vmatprep.subr.mxu0 0.0
        %1342 = vmatpush1.msra.mxu0 0.0
        %1343 = vmatprep.subr.mxu0 0.0
        %1344 = vmatpush1.msra.mxu0 0.0
        %1345 = vmatprep.subr.mxu0 0.0
        %1346 = vmatpush1.msra.mxu0 0.0
        %1347 = vmatprep.subr.mxu0 0.0
        %1348 = vmatpush1.msra.mxu0 0.0
        %1349 = vmatprep.subr.mxu0 0.0
        %1350 = vmatpush1.msra.mxu0 0.0
        %1351 = vmatprep.subr.mxu0 0.0
        %1352 = vmatpush1.msra.mxu0 0.0
        %1353 = vmatprep.subr.mxu0 0.0
        %1354 = vmatpush1.msra.mxu0 0.0
        %1355 = vmatprep.subr.mxu0 0.0
        %1356 = vmatpush1.msra.mxu0 0.0
        %1357 = vmatprep.subr.mxu0 0.0
        %1358 = vmatpush1.msra.mxu0 %v1323
        %1359 = vmatprep.subr.mxu0 0.0
        %1360 = vmatpush2.msra.mxu0 0.0
        %1361 = vmatprep.subr.mxu0 0.0
        %1362 = vmatpush2.msra.mxu0 0.0
        %1363 = vmatprep.subr.mxu0 0.0
        %1364 = vmatpush2.msra.mxu0 0.0
        %1365 = vmatprep.subr.mxu0 0.0
        %1366 = vmatpush2.msra.mxu0 0.0
        %1367 = vmatprep.subr.mxu0 0.0
        %1368 = vmatpush2.msra.mxu0 0.0
        %1369 = vmatprep.subr.mxu0 0.0
        %1370 = vmatpush2.msra.mxu0 0.0
        %1371 = vmatprep.subr.mxu0 0.0
        %1372 = vmatpush2.msra.mxu0 0.0
        %1373 = vmatprep.subr.mxu0 0.0
        %1374 = vmatpush2.msra.mxu0 0.0
        %1375 = vmatprep.subr.mxu0 0.0
        %1376 = vmatpush2.msra.mxu0 0.0
        %1377 = vmatprep.subr.mxu0 0.0
        %1378 = vmatpush2.msra.mxu0 0.0
        %1379 = vmatprep.subr.mxu0 0.0
        %1380 = vmatpush2.msra.mxu0 0.0
        %1381 = vmatprep.subr.mxu0 0.0
        %1382 = vmatpush2.msra.mxu0 0.0
        %1383 = vmatprep.subr.mxu0 0.0
        %1384 = vmatpush2.msra.mxu0 0.0
        %1385 = vmatprep.subr.mxu0 0.0
        %1386 = vmatpush2.msra.mxu0 0.0
        %1387 = vmatprep.subr.mxu0 0.0
        %1388 = vmatpush2.msra.mxu0 0.0
        %1389 = vmatprep.subr.mxu0 0.0
        %1390 = vmatpush2.msra.mxu0 0.0
        %1391 = vmatprep.mubr.f32.mxu0 0.0
        %1392 = vmatmul.mubr.f32.gmra.mxu0 %v1325
        %v1393 = vpop.f32.mrf.mxu0
        %v1394 = vadd.f32 0.0, %v1393
        %v1395 = vpop.f32.mrf.mxu0
        %1396 = vdwg.mxu0
        %v1397 = vrcp.pop %v1321
        %v1398 = vmul.f32 %v1394, %v1397
        %1400 = vrot.lane.b32.xlu0 %v1398, 24
        %v1401 = vpop.permute.xlu0 %1400
        %vm1403 = vcmask 261312
        %1404 = vst.msk [vmem:[#allocation4] sm:$0xff] %vm1403, %v1401
        %v1405 = vld [vmem:[#allocation4] sm:$0xff]
        %v1406 = vld [vmem:[#allocation13] sm:$0xff]
        %v1407 = vld [vmem:[#allocation13 + $0x8] sm:$0xff]
        %v1408 = vld [vmem:[#allocation13 + $0x10] sm:$0xff]
        %v1409 = vld [vmem:[#allocation13 + $0x18] sm:$0xff]
        %v1410 = vld [vmem:[%s5] sm:$0x1]
        %v1412 = vlaneseq
        %v1413 = vshrl.u32 %v1412, 7
        %v1414 = vsub.s32 0, %v1413
        %v1415 = vrot.slane %v1410, %v1414
        %v1418 = vsel %vm666, %v1405, 0
        %1420 = vmatprep.subr.mxu0 0.0
        %1421 = vmatpush1.msra.mxu0 0.0
        %1422 = vmatprep.subr.mxu0 0.0
        %1423 = vmatpush1.msra.mxu0 0.0
        %1424 = vmatprep.subr.mxu0 0.0
        %1425 = vmatpush1.msra.mxu0 0.0
        %1426 = vmatprep.subr.mxu0 0.0
        %1427 = vmatpush1.msra.mxu0 0.0
        %1428 = vmatprep.subr.mxu0 0.0
        %1429 = vmatpush1.msra.mxu0 0.0
        %1430 = vmatprep.subr.mxu0 0.0
        %1431 = vmatpush1.msra.mxu0 0.0
        %1432 = vmatprep.subr.mxu0 0.0
        %1433 = vmatpush1.msra.mxu0 0.0
        %1434 = vmatprep.subr.mxu0 0.0
        %1435 = vmatpush1.msra.mxu0 0.0
        %1436 = vmatprep.subr.mxu0 0.0
        %1437 = vmatpush1.msra.mxu0 0.0
        %1438 = vmatprep.subr.mxu0 0.0
        %1439 = vmatpush1.msra.mxu0 0.0
        %1440 = vmatprep.subr.mxu0 0.0
        %1441 = vmatpush1.msra.mxu0 0.0
        %1442 = vmatprep.subr.mxu0 0.0
        %1443 = vmatpush1.msra.mxu0 0.0
        %1444 = vmatprep.subr.mxu0 0.0
        %1445 = vmatpush1.msra.mxu0 %v1409
        %1446 = vmatprep.subr.mxu0 0.0
        %1447 = vmatpush1.msra.mxu0 %v1408
        %1448 = vmatprep.subr.mxu0 0.0
        %1449 = vmatpush1.msra.mxu0 %v1407
        %1450 = vmatprep.subr.mxu0 0.0
        %1451 = vmatpush1.msra.mxu0 %v1406
        %1452 = vmatprep.subr.mxu0 0.0
        %1453 = vmatpush2.msra.mxu0 0.0
        %1454 = vmatprep.subr.mxu0 0.0
        %1455 = vmatpush2.msra.mxu0 0.0
        %1456 = vmatprep.subr.mxu0 0.0
        %1457 = vmatpush2.msra.mxu0 0.0
        %1458 = vmatprep.subr.mxu0 0.0
        %1459 = vmatpush2.msra.mxu0 0.0
        %1460 = vmatprep.subr.mxu0 0.0
        %1461 = vmatpush2.msra.mxu0 0.0
        %1462 = vmatprep.subr.mxu0 0.0
        %1463 = vmatpush2.msra.mxu0 0.0
        %1464 = vmatprep.subr.mxu0 0.0
        %1465 = vmatpush2.msra.mxu0 0.0
        %1466 = vmatprep.subr.mxu0 0.0
        %1467 = vmatpush2.msra.mxu0 0.0
        %1468 = vmatprep.subr.mxu0 0.0
        %1469 = vmatpush2.msra.mxu0 0.0
        %1470 = vmatprep.subr.mxu0 0.0
        %1471 = vmatpush2.msra.mxu0 0.0
        %1472 = vmatprep.subr.mxu0 0.0
        %1473 = vmatpush2.msra.mxu0 0.0
        %1474 = vmatprep.subr.mxu0 0.0
        %1475 = vmatpush2.msra.mxu0 0.0
        %1476 = vmatprep.subr.mxu0 0.0
        %1477 = vmatpush2.msra.mxu0 0.0
        %1478 = vmatprep.subr.mxu0 0.0
        %1479 = vmatpush2.msra.mxu0 0.0
        %1480 = vmatprep.subr.mxu0 0.0
        %1481 = vmatpush2.msra.mxu0 0.0
        %1482 = vmatprep.subr.mxu0 0.0
        %1483 = vmatpush2.msra.mxu0 0.0
        %1484 = vmatprep.mubr.f32.mxu0 0.0
        %1485 = vmatmul.mubr.f32.gmra.mxu0 %v1418
        %v1486 = vpop.f32.mrf.mxu0
        %v1487 = vadd.f32 %v1415, %v1486
        %v1488 = vpop.f32.mrf.mxu0
        %1489 = vdwg.mxu0
        %1490 = vst.msk [vmem:[%s338] sm:$0xff] %vm666, %v1487
        %s1491 = sand.u32 %s178, 1
        %s1492 = scalar_lea.sflag [#allocation7], %s1491
        %s1493 = sand.u32 %s178, 1
        %s1494 = smul.addr %s1493, 8
        %s1495 = scalar_lea.vmem [#allocation14], %s1494
        // Predicated region
        $region69: #{tpu_custom_call.1} parent=43 // pred_check
          %p1496 = pneg %p188
        $region70: #{tpu_custom_call.1} parent=43 // pred_check_branch
          %1498 = sbr.rel (%p1496) target = $region72
        $region71: #{tpu_custom_call.1} parent=43 // pred_region
          %s1500 = ssub.s32 128, 128
          %1501 = vsyncadd %s1492, %s1500
          %s1502 = sadd.s32 %s30, %s29
          %s1503 = smul.addr %s1502, 128
          %s1504 = scalar_lea.hbm %s6, %s1503
          %s1506 = sshll.u32 %s1495, 4
          %s1507 = int_to_ptr.vmem [resolvable:$true] %s1506
          %1509 = dma.vmem_to_hbm [thread:$0]  %s1507, 128, %s1504, %s1492
        $region72: #{tpu_custom_call.1} parent=43 // pred_fallthru
          _
      $region44: #{tpu_custom_call.1} parent=5 // pred_fallthru
        _
      %p1510 = scmp.le.s32.totalorder 2, %s20
      // Predicated region
      $region73: #{tpu_custom_call.1} parent=5 // pred_check
        %p1511 = pneg %p1510
      $region74: #{tpu_custom_call.1} parent=5 // pred_check_branch
        %1513 = sbr.rel (%p1511) target = $region76
      $region75: #{tpu_custom_call.1} parent=5 // pred_region
        %s1514 = ssub.s32 %s20, 2
        // Predicated region
        $region77: #{tpu_custom_call.1} parent=75 // pred_check
          %p1515 = pneg %p194
        $region78: #{tpu_custom_call.1} parent=75 // pred_check_branch
          %1517 = sbr.rel (%p1515) target = $region80
        $region79: #{tpu_custom_call.1} parent=75 // pred_region
          %s1518 = sand.u32 %s179, 1
          %s1519 = scalar_lea.sflag [#allocation7], %s1518
          %s1520 = sand.u32 %s179, 1
          %s1521 = smul.addr %s1520, 8
          %s1522 = scalar_lea.vmem [#allocation14], %s1521
          %1523 = dma.done %s1519, 128
        $region80: #{tpu_custom_call.1} parent=75 // pred_fallthru
          _
      $region76: #{tpu_custom_call.1} parent=5 // pred_fallthru
        _
    $region6: #{tpu_custom_call.1} parent=1 // loop_footer
      %s24 = sadd.s32 1, %s20
    $region7: #{tpu_custom_call.1} parent=1 // loop_footer_branch
      %19 = sbr.rel target = $region3
    $region8: #{tpu_custom_call.1} parent=1 // loop_exit
      _
    %1524 = vsyncpa [#allocation6], 1
    %s1525 = scalar_lea.sflag [#allocation6], 1
    %1526 = vsyncpa %s1525, 1
    %1527 = vsyncpa [#allocation9], 1
    %1528 = vsyncpa [#allocation12], 1
    %1529 = vsyncpa [#allocation7], 1
    %s1530 = scalar_lea.sflag [#allocation7], 1
    %1531 = vsyncpa %s1530, 1

</llo_original>
